<compile_context>
chip_gen: v7x
topology: tpu7x:2x2x1
jax: 0.10.0
libtpu: 0.0.40
codegen_flags: <defaults>
</compile_context>

<pallas_src>
import functools

import jax
import jax.numpy as jnp
import numpy as np
from jax import lax
from jax.experimental import pallas as pl
from jax.experimental.pallas import tpu as pltpu


def _convlstm_kernel(x_ref, h_ref, c_ref, w_ref, out_ref, comb_ref, patch_ref,
                     *, B, H, W, Cin, CH, KH, KW, h_start, C_pad, bias_row,
                     compute_dtype):
    # x_ref:     (B, Cin, H*W)                 f32
    # h_ref:     (B, CH,  H*W)                 f32
    # c_ref:     (B, CH,  H*W)                 f32
    # w_ref:     (4*CH, KH*KW*C_pad)           compute_dtype, bias folded in
    # out_ref:   (B, 6*CH, H*W)                f32, rows = [h | c | i | f | o | g]
    # comb_ref:  (C_pad, 128 + B*(HW+128))     f32 scratch (lane-aligned halos)
    # patch_ref: (KH*KW*C_pad, B*HW)           compute_dtype scratch (im2col)
    HW = H * W
    ph, pw = KH // 2, KW // 2
    halo = ph * W + pw                       # flat halo length actually needed
    SEG = HW + 128                           # per-batch lane stride in comb
    Wtot = 128 + B * SEG

    # ---- 1. combined input in VMEM: zeros everywhere, 1.0 in the bias row ----
    row = lax.broadcasted_iota(jnp.int32, (C_pad, Wtot), 0)
    comb_ref[...] = jnp.where(row == bias_row, 1.0, 0.0)
    for b in range(B):
        seg = 128 + b * SEG                  # payload start: multiple of 128
        comb_ref[0:Cin, seg:seg + HW] = x_ref[b]
        comb_ref[h_start:h_start + CH, seg:seg + HW] = h_ref[b]

    # ---- 2. im2col patches from contiguous lane slices (+ horizontal mask) ---
    xpos = lax.broadcasted_iota(jnp.int32, (1, HW), 1)
    xq = (xpos & (W - 1)) if (W & (W - 1)) == 0 else (xpos % W)
    col_masks = {}
    for dx in range(KW):
        if dx == pw:
            col_masks[dx] = None             # centre column: always valid
        else:
            lo = pw - dx
            col_masks[dx] = (xq >= lo) & (xq < W + lo)

    # TODO(synk): the non-centre tap reads below are lane-misaligned (XLU
    # rotate+select); if a bundle audit shows XLU binding at larger H*W,
    # pre-rotate comb once per dx with pltpu.roll and reuse across dy.
    for dy in range(KH):
        for dx in range(KW):
            t = dy * KW + dx
            m = col_masks[dx]
            for b in range(B):
                rs = 128 + b * SEG - halo + dy * W + dx
                sl = comb_ref[:, rs:rs + HW]            # (C_pad, HW) f32
                if m is not None:
                    sl = jnp.where(m, sl, 0.0)          # mask in f32 (v5e-safe)
                patch_ref[t * C_pad:(t + 1) * C_pad,
                          b * HW:(b + 1) * HW] = sl.astype(compute_dtype)

    # ---- 3. single fused-K MXU matmul (f32 accumulate, bias already folded) --
    acc = jnp.dot(w_ref[...], patch_ref[...],
                  preferred_element_type=jnp.float32)   # (4*CH, B*HW)

    # ---- 4. gate math: EUP tanh only (sigmoid(x) == 0.5*tanh(0.5x)+0.5) ------
    sig = 0.5 * jnp.tanh(0.5 * acc[0:3 * CH, :]) + 0.5  # rows = i | f | o
    g = jnp.tanh(acc[3 * CH:, :])

    # ---- 5. cell update + one consolidated lane-dense output slab ------------
    for b in range(B):
        cols = slice(b * HW, (b + 1) * HW)
        i_g = sig[0:CH, cols]
        f_g = sig[CH:2 * CH, cols]
        o_g = sig[2 * CH:3 * CH, cols]
        g_g = g[:, cols]
        c_next = f_g * c_ref[b] + i_g * g_g
        h_next = o_g * jnp.tanh(c_next)
        out_ref[b, 0:CH, :] = h_next
        out_ref[b, CH:2 * CH, :] = c_next
        out_ref[b, 2 * CH:5 * CH, :] = sig[:, cols]     # i | f | o
        out_ref[b, 5 * CH:6 * CH, :] = g_g              # g


def conv_lstm_cell_pallas(x_nchw, h_nchw, c_nchw, weight, bias,
                          compute_dtype=jnp.bfloat16):
    """ConvLSTMCell forward.

    Args:
      x_nchw: (B, Cin, H, W) float32
      h_nchw: (B, CH, H, W) float32
      c_nchw: (B, CH, H, W) float32
      weight: (4*CH, Cin+CH, KH, KW) float32  (PyTorch Conv2d layout)
      bias:   (4*CH,) float32
      compute_dtype: matmul operand dtype (bf16 fast path, f32 precise path).
    Returns:
      (h_next, c_next, [f, i, g, o]) all NCHW, matching the PyTorch module.
    """
    B, Cin, H, W = x_nchw.shape
    CH = h_nchw.shape[1]
    KH, KW = weight.shape[2], weight.shape[3]
    assert weight.shape == (4 * CH, Cin + CH, KH, KW)
    assert KH % 2 == 1 and KW % 2 == 1, "flat-halo scheme assumes odd kernels"
    assert KH // 2 < H and KW // 2 < W, "kernel larger than image not supported"
    HW = H * W
    ph, pw = KH // 2, KW // 2
    halo = ph * W + pw
    assert halo <= 128, "halo must fit the 128-lane guard band"

    # Sublane-aligned channel layout: x rows [0, Cin), h rows [h_start, +CH).
    h_start = ((Cin + 7) // 8) * 8
    C_pad = ((h_start + CH + 15) // 16) * 16
    if h_start > Cin:                     # spare row between x and h blocks
        bias_row = Cin
    elif C_pad > h_start + CH:            # spare row after the h block
        bias_row = h_start + CH
    else:
        # TODO(synk): fall back to a separate f32 bias add when the padded
        # channel layout has no spare row to carry the constant-1 bias input.
        raise NotImplementedError("no spare padded channel row for the bias")
    K_pad = KH * KW * C_pad
    SEG = HW + 128
    Wtot = 128 + B * SEG

    # Wrapper glue is free reshapes only: no transpose, no concat, no pad.
    x = x_nchw.reshape(B, Cin, HW)
    h = h_nchw.reshape(B, CH, HW)
    c = c_nchw.reshape(B, CH, HW)

    # One-time tiny weight relayout: tap-major K = (dy, dx, c_pad), channels
    # padded, bias folded into the centre-tap column of the spare row.
    w_t = jnp.transpose(weight, (0, 2, 3, 1))                 # (4CH,KH,KW,C)
    w_pad = jnp.zeros((4 * CH, KH, KW, C_pad), jnp.float32)
    w_pad = w_pad.at[..., 0:Cin].set(w_t[..., 0:Cin])
    w_pad = w_pad.at[..., h_start:h_start + CH].set(w_t[..., Cin:])
    w_pad = w_pad.at[:, ph, pw, bias_row].set(bias.astype(jnp.float32))
    w_mat = w_pad.reshape(4 * CH, K_pad).astype(compute_dtype)

    kernel = functools.partial(
        _convlstm_kernel, B=B, H=H, W=W, Cin=Cin, CH=CH, KH=KH, KW=KW,
        h_start=h_start, C_pad=C_pad, bias_row=bias_row,
        compute_dtype=compute_dtype)

    # Single invocation; batch lives on the lane axis inside the kernel.
    out = pl.pallas_call(
        kernel,
        out_shape=jax.ShapeDtypeStruct((B, 6 * CH, HW), jnp.float32),
        grid_spec=pltpu.PrefetchScalarGridSpec(
            num_scalar_prefetch=0,
            grid=(1,),
            in_specs=[
                pl.BlockSpec((B, Cin, HW), lambda i: (0, 0, 0)),   # x
                pl.BlockSpec((B, CH, HW), lambda i: (0, 0, 0)),    # h
                pl.BlockSpec((B, CH, HW), lambda i: (0, 0, 0)),    # c
                pl.BlockSpec((4 * CH, K_pad), lambda i: (0, 0)),   # weight
            ],
            out_specs=pl.BlockSpec((B, 6 * CH, HW), lambda i: (0, 0, 0)),
            scratch_shapes=[
                pltpu.VMEM((C_pad, Wtot), jnp.float32),       # halo-padded comb
                pltpu.VMEM((K_pad, B * HW), compute_dtype),   # im2col patches
            ],
        ),
        compiler_params=pltpu.CompilerParams(
            dimension_semantics=("arbitrary",)),
    )(x, h, c, w_mat)

    # Free-ish wrapper slices of the stacked [h | c | i | f | o | g] slab.
    out = out.reshape(B, 6 * CH, H, W)
    h_next = out[:, 0:CH]
    c_next = out[:, CH:2 * CH]
    i_g = out[:, 2 * CH:3 * CH]
    f_g = out[:, 3 * CH:4 * CH]
    o_g = out[:, 4 * CH:5 * CH]
    g_g = out[:, 5 * CH:6 * CH]
    return h_next, c_next, [f_g, i_g, g_g, o_g]


def conv_lstm_cell_ref(x, h, c, weight, bias):
    """Pure-JAX f32 reference (NCHW, same semantics as the PyTorch module)."""
    comb = jnp.concatenate([x, h], axis=1)
    KH, KW = weight.shape[2], weight.shape[3]
    conv = lax.conv_general_dilated(
        comb, weight, window_strides=(1, 1),
        padding=((KH // 2, KH // 2), (KW // 2, KW // 2)),
        dimension_numbers=("NCHW", "OIHW", "NCHW"),
        precision=lax.Precision.HIGHEST)
    conv = conv + bias.reshape(1, -1, 1, 1)
    cc_i, cc_f, cc_o, cc_g = jnp.split(conv, 4, axis=1)
    i = jax.nn.sigmoid(cc_i)
    f = jax.nn.sigmoid(cc_f)
    o = jax.nn.sigmoid(cc_o)
    g = jnp.tanh(cc_g)
    c_next = f * c + i * g
    h_next = o * jnp.tanh(c_next)
    return h_next, c_next, [f, i, g, o]


if __name__ == "__main__":
    # Small deterministic example consistent with the module:
    # input_dim=4, hidden_dim=8, kernel_size=(3, 3), bias=True, 16x16, batch 2.
    B, Cin, CH, H, W = 2, 4, 8, 16, 16
    KH, KW = 3, 3

    key = jax.random.PRNGKey(0)
    kx, kh, kc, kw, kb = jax.random.split(key, 5)

    x = jax.random.normal(kx, (B, Cin, H, W), jnp.float32)
    h0 = jax.random.normal(kh, (B, CH, H, W), jnp.float32)
    c0 = jax.random.normal(kc, (B, CH, H, W), jnp.float32)

    fan_in = (Cin + CH) * KH * KW
    bound = 1.0 / np.sqrt(fan_in)
    weight = jax.random.uniform(kw, (4 * CH, Cin + CH, KH, KW), jnp.float32,
                                minval=-bound, maxval=bound)
    bias = jax.random.uniform(kb, (4 * CH,), jnp.float32,
                              minval=-bound, maxval=bound)

    # Fast path (bf16 matmul operands, f32 accumulate / elementwise).
    h_next, c_next, gates = conv_lstm_cell_pallas(x, h0, c0, weight, bias)
    jax.block_until_ready((h_next, c_next, gates))

    h_ref, c_ref, gates_ref = conv_lstm_cell_ref(x, h0, c0, weight, bias)
    np.testing.assert_allclose(np.asarray(h_next), np.asarray(h_ref),
                               rtol=2e-2, atol=2e-2)
    np.testing.assert_allclose(np.asarray(c_next), np.asarray(c_ref),
                               rtol=2e-2, atol=2e-2)
    for g_p, g_r in zip(gates, gates_ref):
        np.testing.assert_allclose(np.asarray(g_p), np.asarray(g_r),
                                   rtol=2e-2, atol=2e-2)

    # Strict f32-operand check: tight enough to catch any layout/indexing bug
    # (those show up as O(0.1..1) errors) while staying robust to the exact
    # matmul precision mode used by the backend.
    h32, c32, gates32 = conv_lstm_cell_pallas(x, h0, c0, weight, bias,
                                              compute_dtype=jnp.float32)
    jax.block_until_ready((h32, c32, gates32))
    np.testing.assert_allclose(np.asarray(h32), np.asarray(h_ref),
                               rtol=5e-3, atol=5e-3)
    np.testing.assert_allclose(np.asarray(c32), np.asarray(c_ref),
                               rtol=5e-3, atol=5e-3)
    for g_p, g_r in zip(gates32, gates_ref):
        np.testing.assert_allclose(np.asarray(g_p), np.asarray(g_r),
                                   rtol=5e-3, atol=5e-3)

    print("KERNEL_OK")
</pallas_src>

<mosaic_0001>
module attributes {stable_mosaic.version = 11 : i64} {
  func.func @_convlstm_kernel(%arg0: i32, %arg1: memref<2x4x256xf32, #tpu.memory_space<vmem>>, %arg2: memref<2x8x256xf32, #tpu.memory_space<vmem>>, %arg3: memref<2x8x256xf32, #tpu.memory_space<vmem>>, %arg4: memref<32x144xbf16, #tpu.memory_space<vmem>>, %arg5: memref<2x48x256xf32, #tpu.memory_space<vmem>>, %arg6: memref<16x896xf32, #tpu.memory_space<vmem>>, %arg7: memref<144x512xbf16, #tpu.memory_space<vmem>>) attributes {dimension_semantics = [#tpu.dimension_semantics<arbitrary>], iteration_bounds = array<i64: 1>, scalar_prefetch = 0 : i64, scratch_operands = 2 : i64, tpu.core_type = #tpu.core_type<tc>, window_params = [{pipeline_mode = #tpu.pipeline_mode<synchronous>, transform_indices = @transform_0, window_bounds = array<i64: 2, 4, 256>}, {pipeline_mode = #tpu.pipeline_mode<synchronous>, transform_indices = @transform_1, window_bounds = array<i64: 2, 8, 256>}, {pipeline_mode = #tpu.pipeline_mode<synchronous>, transform_indices = @transform_2, window_bounds = array<i64: 2, 8, 256>}, {pipeline_mode = #tpu.pipeline_mode<synchronous>, transform_indices = @transform_3, window_bounds = array<i64: 32, 144>}, {pipeline_mode = #tpu.pipeline_mode<synchronous>, transform_indices = @transform_4, window_bounds = array<i64: 2, 48, 256>}]} {
    %0 = tpu.iota {dimensions = array<i32: 0>} : vector<16x896xi32>
    %c4_i32 = arith.constant 4 : i32
    %1 = vector.broadcast %c4_i32 : i32 to vector<16x896xi32>
    %2 = arith.cmpi eq, %0, %1 : vector<16x896xi32>
    %cst = arith.constant 1.000000e+00 : f32
    %cst_0 = arith.constant 0.000000e+00 : f32
    %3 = vector.broadcast %cst : f32 to vector<16x896xf32>
    %4 = vector.broadcast %cst_0 : f32 to vector<16x896xf32>
    %5 = arith.select %2, %3, %4 : vector<16x896xi1>, vector<16x896xf32>
    %c0 = arith.constant 0 : index
    %c0_1 = arith.constant 0 : index
    %6 = vector.load %arg6[%c0, %c0_1] : memref<16x896xf32, #tpu.memory_space<vmem>>, vector<16x896xf32>
    tpu.vector_store %arg6[%c0, %c0_1], %5 {strides = array<i32>} : memref<16x896xf32, #tpu.memory_space<vmem>>, vector<16x896xf32>,
    %c0_2 = arith.constant 0 : index
    %c0_3 = arith.constant 0 : index
    %c0_4 = arith.constant 0 : index
    %7 = vector.load %arg1[%c0_2, %c0_3, %c0_4] : memref<2x4x256xf32, #tpu.memory_space<vmem>>, vector<1x4x256xf32>
    %8 = vector.shape_cast %7 : vector<1x4x256xf32> to vector<4x256xf32>
    %c0_5 = arith.constant 0 : index
    %c128 = arith.constant 128 : index
    %9 = vector.load %arg6[%c0_5, %c128] : memref<16x896xf32, #tpu.memory_space<vmem>>, vector<4x256xf32>
    tpu.vector_store %arg6[%c0_5, %c128], %8 {strides = array<i32>} : memref<16x896xf32, #tpu.memory_space<vmem>>, vector<4x256xf32>,
    %c0_6 = arith.constant 0 : index
    %c0_7 = arith.constant 0 : index
    %c0_8 = arith.constant 0 : index
    %10 = vector.load %arg2[%c0_6, %c0_7, %c0_8] : memref<2x8x256xf32, #tpu.memory_space<vmem>>, vector<1x8x256xf32>
    %11 = vector.shape_cast %10 : vector<1x8x256xf32> to vector<8x256xf32>
    %c8 = arith.constant 8 : index
    %c128_9 = arith.constant 128 : index
    %12 = vector.load %arg6[%c8, %c128_9] : memref<16x896xf32, #tpu.memory_space<vmem>>, vector<8x256xf32>
    tpu.vector_store %arg6[%c8, %c128_9], %11 {strides = array<i32>} : memref<16x896xf32, #tpu.memory_space<vmem>>, vector<8x256xf32>,
    %c1 = arith.constant 1 : index
    %c0_10 = arith.constant 0 : index
    %c0_11 = arith.constant 0 : index
    %13 = vector.load %arg1[%c1, %c0_10, %c0_11] : memref<2x4x256xf32, #tpu.memory_space<vmem>>, vector<1x4x256xf32>
    %14 = vector.shape_cast %13 : vector<1x4x256xf32> to vector<4x256xf32>
    %c0_12 = arith.constant 0 : index
    %c512 = arith.constant 512 : index
    %15 = vector.load %arg6[%c0_12, %c512] : memref<16x896xf32, #tpu.memory_space<vmem>>, vector<4x256xf32>
    tpu.vector_store %arg6[%c0_12, %c512], %14 {strides = array<i32>} : memref<16x896xf32, #tpu.memory_space<vmem>>, vector<4x256xf32>,
    %c1_13 = arith.constant 1 : index
    %c0_14 = arith.constant 0 : index
    %c0_15 = arith.constant 0 : index
    %16 = vector.load %arg2[%c1_13, %c0_14, %c0_15] : memref<2x8x256xf32, #tpu.memory_space<vmem>>, vector<1x8x256xf32>
    %17 = vector.shape_cast %16 : vector<1x8x256xf32> to vector<8x256xf32>
    %c8_16 = arith.constant 8 : index
    %c512_17 = arith.constant 512 : index
    %18 = vector.load %arg6[%c8_16, %c512_17] : memref<16x896xf32, #tpu.memory_space<vmem>>, vector<8x256xf32>
    tpu.vector_store %arg6[%c8_16, %c512_17], %17 {strides = array<i32>} : memref<16x896xf32, #tpu.memory_space<vmem>>, vector<8x256xf32>,
    %19 = tpu.iota {dimensions = array<i32: 1>} : vector<1x256xi32>
    %c15_i32 = arith.constant 15 : i32
    %20 = vector.broadcast %c15_i32 : i32 to vector<1x256xi32>
    %21 = arith.andi %19, %20 : vector<1x256xi32>
    %c1_i32 = arith.constant 1 : i32
    %22 = vector.broadcast %c1_i32 : i32 to vector<1x256xi32>
    %23 = arith.cmpi sge, %21, %22 : vector<1x256xi32>
    %c17_i32 = arith.constant 17 : i32
    %24 = vector.broadcast %c17_i32 : i32 to vector<1x256xi32>
    %25 = arith.cmpi slt, %21, %24 : vector<1x256xi32>
    %26 = arith.andi %23, %25 : vector<1x256xi1>
    %c-1_i32 = arith.constant -1 : i32
    %27 = vector.broadcast %c-1_i32 : i32 to vector<1x256xi32>
    %28 = arith.cmpi sge, %21, %27 : vector<1x256xi32>
    %c15_i32_18 = arith.constant 15 : i32
    %29 = vector.broadcast %c15_i32_18 : i32 to vector<1x256xi32>
    %30 = arith.cmpi slt, %21, %29 : vector<1x256xi32>
    %31 = arith.andi %28, %30 : vector<1x256xi1>
    %c0_19 = arith.constant 0 : index
    %c111 = arith.constant 111 : index
    %32 = vector.load %arg6[%c0_19, %c111] : memref<16x896xf32, #tpu.memory_space<vmem>>, vector<16x256xf32>
    %cst_20 = arith.constant 0.000000e+00 : f32
    %33 = vector.shape_cast %26 : vector<1x256xi1> to vector<1x256xi1>
    %34 = vector.broadcast %33 : vector<1x256xi1> to vector<16x256xi1>
    %35 = vector.broadcast %cst_20 : f32 to vector<16x256xf32>
    %36 = arith.select %34, %32, %35 : vector<16x256xi1>, vector<16x256xf32>
    %37 = arith.truncf %36 : vector<16x256xf32> to vector<16x256xbf16>
    %c0_21 = arith.constant 0 : index
    %c0_22 = arith.constant 0 : index
    %38 = vector.load %arg7[%c0_21, %c0_22] : memref<144x512xbf16, #tpu.memory_space<vmem>>, vector<16x256xbf16>
    tpu.vector_store %arg7[%c0_21, %c0_22], %37 {strides = array<i32>} : memref<144x512xbf16, #tpu.memory_space<vmem>>, vector<16x256xbf16>,
    %c0_23 = arith.constant 0 : index
    %c495 = arith.constant 495 : index
    %39 = vector.load %arg6[%c0_23, %c495] : memref<16x896xf32, #tpu.memory_space<vmem>>, vector<16x256xf32>
    %cst_24 = arith.constant 0.000000e+00 : f32
    %40 = vector.shape_cast %26 : vector<1x256xi1> to vector<1x256xi1>
    %41 = vector.broadcast %40 : vector<1x256xi1> to vector<16x256xi1>
    %42 = vector.broadcast %cst_24 : f32 to vector<16x256xf32>
    %43 = arith.select %41, %39, %42 : vector<16x256xi1>, vector<16x256xf32>
    %44 = arith.truncf %43 : vector<16x256xf32> to vector<16x256xbf16>
    %c0_25 = arith.constant 0 : index
    %c256 = arith.constant 256 : index
    %45 = vector.load %arg7[%c0_25, %c256] : memref<144x512xbf16, #tpu.memory_space<vmem>>, vector<16x256xbf16>
    tpu.vector_store %arg7[%c0_25, %c256], %44 {strides = array<i32>} : memref<144x512xbf16, #tpu.memory_space<vmem>>, vector<16x256xbf16>,
    %c0_26 = arith.constant 0 : index
    %c112 = arith.constant 112 : index
    %46 = vector.load %arg6[%c0_26, %c112] : memref<16x896xf32, #tpu.memory_space<vmem>>, vector<16x256xf32>
    %47 = arith.truncf %46 : vector<16x256xf32> to vector<16x256xbf16>
    %c16 = arith.constant 16 : index
    %c0_27 = arith.constant 0 : index
    %48 = vector.load %arg7[%c16, %c0_27] : memref<144x512xbf16, #tpu.memory_space<vmem>>, vector<16x256xbf16>
    tpu.vector_store %arg7[%c16, %c0_27], %47 {strides = array<i32>} : memref<144x512xbf16, #tpu.memory_space<vmem>>, vector<16x256xbf16>,
    %c0_28 = arith.constant 0 : index
    %c496 = arith.constant 496 : index
    %49 = vector.load %arg6[%c0_28, %c496] : memref<16x896xf32, #tpu.memory_space<vmem>>, vector<16x256xf32>
    %50 = arith.truncf %49 : vector<16x256xf32> to vector<16x256xbf16>
    %c16_29 = arith.constant 16 : index
    %c256_30 = arith.constant 256 : index
    %51 = vector.load %arg7[%c16_29, %c256_30] : memref<144x512xbf16, #tpu.memory_space<vmem>>, vector<16x256xbf16>
    tpu.vector_store %arg7[%c16_29, %c256_30], %50 {strides = array<i32>} : memref<144x512xbf16, #tpu.memory_space<vmem>>, vector<16x256xbf16>,
    %c0_31 = arith.constant 0 : index
    %c113 = arith.constant 113 : index
    %52 = vector.load %arg6[%c0_31, %c113] : memref<16x896xf32, #tpu.memory_space<vmem>>, vector<16x256xf32>
    %cst_32 = arith.constant 0.000000e+00 : f32
    %53 = vector.shape_cast %31 : vector<1x256xi1> to vector<1x256xi1>
    %54 = vector.broadcast %53 : vector<1x256xi1> to vector<16x256xi1>
    %55 = vector.broadcast %cst_32 : f32 to vector<16x256xf32>
    %56 = arith.select %54, %52, %55 : vector<16x256xi1>, vector<16x256xf32>
    %57 = arith.truncf %56 : vector<16x256xf32> to vector<16x256xbf16>
    %c32 = arith.constant 32 : index
    %c0_33 = arith.constant 0 : index
    %58 = vector.load %arg7[%c32, %c0_33] : memref<144x512xbf16, #tpu.memory_space<vmem>>, vector<16x256xbf16>
    tpu.vector_store %arg7[%c32, %c0_33], %57 {strides = array<i32>} : memref<144x512xbf16, #tpu.memory_space<vmem>>, vector<16x256xbf16>,
    %c0_34 = arith.constant 0 : index
    %c497 = arith.constant 497 : index
    %59 = vector.load %arg6[%c0_34, %c497] : memref<16x896xf32, #tpu.memory_space<vmem>>, vector<16x256xf32>
    %cst_35 = arith.constant 0.000000e+00 : f32
    %60 = vector.shape_cast %31 : vector<1x256xi1> to vector<1x256xi1>
    %61 = vector.broadcast %60 : vector<1x256xi1> to vector<16x256xi1>
    %62 = vector.broadcast %cst_35 : f32 to vector<16x256xf32>
    %63 = arith.select %61, %59, %62 : vector<16x256xi1>, vector<16x256xf32>
    %64 = arith.truncf %63 : vector<16x256xf32> to vector<16x256xbf16>
    %c32_36 = arith.constant 32 : index
    %c256_37 = arith.constant 256 : index
    %65 = vector.load %arg7[%c32_36, %c256_37] : memref<144x512xbf16, #tpu.memory_space<vmem>>, vector<16x256xbf16>
    tpu.vector_store %arg7[%c32_36, %c256_37], %64 {strides = array<i32>} : memref<144x512xbf16, #tpu.memory_space<vmem>>, vector<16x256xbf16>,
    %c0_38 = arith.constant 0 : index
    %c127 = arith.constant 127 : index
    %66 = vector.load %arg6[%c0_38, %c127] : memref<16x896xf32, #tpu.memory_space<vmem>>, vector<16x256xf32>
    %cst_39 = arith.constant 0.000000e+00 : f32
    %67 = vector.shape_cast %26 : vector<1x256xi1> to vector<1x256xi1>
    %68 = vector.broadcast %67 : vector<1x256xi1> to vector<16x256xi1>
    %69 = vector.broadcast %cst_39 : f32 to vector<16x256xf32>
    %70 = arith.select %68, %66, %69 : vector<16x256xi1>, vector<16x256xf32>
    %71 = arith.truncf %70 : vector<16x256xf32> to vector<16x256xbf16>
    %c48 = arith.constant 48 : index
    %c0_40 = arith.constant 0 : index
    %72 = vector.load %arg7[%c48, %c0_40] : memref<144x512xbf16, #tpu.memory_space<vmem>>, vector<16x256xbf16>
    tpu.vector_store %arg7[%c48, %c0_40], %71 {strides = array<i32>} : memref<144x512xbf16, #tpu.memory_space<vmem>>, vector<16x256xbf16>,
    %c0_41 = arith.constant 0 : index
    %c511 = arith.constant 511 : index
    %73 = vector.load %arg6[%c0_41, %c511] : memref<16x896xf32, #tpu.memory_space<vmem>>, vector<16x256xf32>
    %cst_42 = arith.constant 0.000000e+00 : f32
    %74 = vector.shape_cast %26 : vector<1x256xi1> to vector<1x256xi1>
    %75 = vector.broadcast %74 : vector<1x256xi1> to vector<16x256xi1>
    %76 = vector.broadcast %cst_42 : f32 to vector<16x256xf32>
    %77 = arith.select %75, %73, %76 : vector<16x256xi1>, vector<16x256xf32>
    %78 = arith.truncf %77 : vector<16x256xf32> to vector<16x256xbf16>
    %c48_43 = arith.constant 48 : index
    %c256_44 = arith.constant 256 : index
    %79 = vector.load %arg7[%c48_43, %c256_44] : memref<144x512xbf16, #tpu.memory_space<vmem>>, vector<16x256xbf16>
    tpu.vector_store %arg7[%c48_43, %c256_44], %78 {strides = array<i32>} : memref<144x512xbf16, #tpu.memory_space<vmem>>, vector<16x256xbf16>,
    %c0_45 = arith.constant 0 : index
    %c128_46 = arith.constant 128 : index
    %80 = vector.load %arg6[%c0_45, %c128_46] : memref<16x896xf32, #tpu.memory_space<vmem>>, vector<16x256xf32>
    %81 = arith.truncf %80 : vector<16x256xf32> to vector<16x256xbf16>
    %c64 = arith.constant 64 : index
    %c0_47 = arith.constant 0 : index
    %82 = vector.load %arg7[%c64, %c0_47] : memref<144x512xbf16, #tpu.memory_space<vmem>>, vector<16x256xbf16>
    tpu.vector_store %arg7[%c64, %c0_47], %81 {strides = array<i32>} : memref<144x512xbf16, #tpu.memory_space<vmem>>, vector<16x256xbf16>,
    %c0_48 = arith.constant 0 : index
    %c512_49 = arith.constant 512 : index
    %83 = vector.load %arg6[%c0_48, %c512_49] : memref<16x896xf32, #tpu.memory_space<vmem>>, vector<16x256xf32>
    %84 = arith.truncf %83 : vector<16x256xf32> to vector<16x256xbf16>
    %c64_50 = arith.constant 64 : index
    %c256_51 = arith.constant 256 : index
    %85 = vector.load %arg7[%c64_50, %c256_51] : memref<144x512xbf16, #tpu.memory_space<vmem>>, vector<16x256xbf16>
    tpu.vector_store %arg7[%c64_50, %c256_51], %84 {strides = array<i32>} : memref<144x512xbf16, #tpu.memory_space<vmem>>, vector<16x256xbf16>,
    %c0_52 = arith.constant 0 : index
    %c129 = arith.constant 129 : index
    %86 = vector.load %arg6[%c0_52, %c129] : memref<16x896xf32, #tpu.memory_space<vmem>>, vector<16x256xf32>
    %cst_53 = arith.constant 0.000000e+00 : f32
    %87 = vector.shape_cast %31 : vector<1x256xi1> to vector<1x256xi1>
    %88 = vector.broadcast %87 : vector<1x256xi1> to vector<16x256xi1>
    %89 = vector.broadcast %cst_53 : f32 to vector<16x256xf32>
    %90 = arith.select %88, %86, %89 : vector<16x256xi1>, vector<16x256xf32>
    %91 = arith.truncf %90 : vector<16x256xf32> to vector<16x256xbf16>
    %c80 = arith.constant 80 : index
    %c0_54 = arith.constant 0 : index
    %92 = vector.load %arg7[%c80, %c0_54] : memref<144x512xbf16, #tpu.memory_space<vmem>>, vector<16x256xbf16>
    tpu.vector_store %arg7[%c80, %c0_54], %91 {strides = array<i32>} : memref<144x512xbf16, #tpu.memory_space<vmem>>, vector<16x256xbf16>,
    %c0_55 = arith.constant 0 : index
    %c513 = arith.constant 513 : index
    %93 = vector.load %arg6[%c0_55, %c513] : memref<16x896xf32, #tpu.memory_space<vmem>>, vector<16x256xf32>
    %cst_56 = arith.constant 0.000000e+00 : f32
    %94 = vector.shape_cast %31 : vector<1x256xi1> to vector<1x256xi1>
    %95 = vector.broadcast %94 : vector<1x256xi1> to vector<16x256xi1>
    %96 = vector.broadcast %cst_56 : f32 to vector<16x256xf32>
    %97 = arith.select %95, %93, %96 : vector<16x256xi1>, vector<16x256xf32>
    %98 = arith.truncf %97 : vector<16x256xf32> to vector<16x256xbf16>
    %c80_57 = arith.constant 80 : index
    %c256_58 = arith.constant 256 : index
    %99 = vector.load %arg7[%c80_57, %c256_58] : memref<144x512xbf16, #tpu.memory_space<vmem>>, vector<16x256xbf16>
    tpu.vector_store %arg7[%c80_57, %c256_58], %98 {strides = array<i32>} : memref<144x512xbf16, #tpu.memory_space<vmem>>, vector<16x256xbf16>,
    %c0_59 = arith.constant 0 : index
    %c143 = arith.constant 143 : index
    %100 = vector.load %arg6[%c0_59, %c143] : memref<16x896xf32, #tpu.memory_space<vmem>>, vector<16x256xf32>
    %cst_60 = arith.constant 0.000000e+00 : f32
    %101 = vector.shape_cast %26 : vector<1x256xi1> to vector<1x256xi1>
    %102 = vector.broadcast %101 : vector<1x256xi1> to vector<16x256xi1>
    %103 = vector.broadcast %cst_60 : f32 to vector<16x256xf32>
    %104 = arith.select %102, %100, %103 : vector<16x256xi1>, vector<16x256xf32>
    %105 = arith.truncf %104 : vector<16x256xf32> to vector<16x256xbf16>
    %c96 = arith.constant 96 : index
    %c0_61 = arith.constant 0 : index
    %106 = vector.load %arg7[%c96, %c0_61] : memref<144x512xbf16, #tpu.memory_space<vmem>>, vector<16x256xbf16>
    tpu.vector_store %arg7[%c96, %c0_61], %105 {strides = array<i32>} : memref<144x512xbf16, #tpu.memory_space<vmem>>, vector<16x256xbf16>,
    %c0_62 = arith.constant 0 : index
    %c527 = arith.constant 527 : index
    %107 = vector.load %arg6[%c0_62, %c527] : memref<16x896xf32, #tpu.memory_space<vmem>>, vector<16x256xf32>
    %cst_63 = arith.constant 0.000000e+00 : f32
    %108 = vector.shape_cast %26 : vector<1x256xi1> to vector<1x256xi1>
    %109 = vector.broadcast %108 : vector<1x256xi1> to vector<16x256xi1>
    %110 = vector.broadcast %cst_63 : f32 to vector<16x256xf32>
    %111 = arith.select %109, %107, %110 : vector<16x256xi1>, vector<16x256xf32>
    %112 = arith.truncf %111 : vector<16x256xf32> to vector<16x256xbf16>
    %c96_64 = arith.constant 96 : index
    %c256_65 = arith.constant 256 : index
    %113 = vector.load %arg7[%c96_64, %c256_65] : memref<144x512xbf16, #tpu.memory_space<vmem>>, vector<16x256xbf16>
    tpu.vector_store %arg7[%c96_64, %c256_65], %112 {strides = array<i32>} : memref<144x512xbf16, #tpu.memory_space<vmem>>, vector<16x256xbf16>,
    %c0_66 = arith.constant 0 : index
    %c144 = arith.constant 144 : index
    %114 = vector.load %arg6[%c0_66, %c144] : memref<16x896xf32, #tpu.memory_space<vmem>>, vector<16x256xf32>
    %115 = arith.truncf %114 : vector<16x256xf32> to vector<16x256xbf16>
    %c112_67 = arith.constant 112 : index
    %c0_68 = arith.constant 0 : index
    %116 = vector.load %arg7[%c112_67, %c0_68] : memref<144x512xbf16, #tpu.memory_space<vmem>>, vector<16x256xbf16>
    tpu.vector_store %arg7[%c112_67, %c0_68], %115 {strides = array<i32>} : memref<144x512xbf16, #tpu.memory_space<vmem>>, vector<16x256xbf16>,
    %c0_69 = arith.constant 0 : index
    %c528 = arith.constant 528 : index
    %117 = vector.load %arg6[%c0_69, %c528] : memref<16x896xf32, #tpu.memory_space<vmem>>, vector<16x256xf32>
    %118 = arith.truncf %117 : vector<16x256xf32> to vector<16x256xbf16>
    %c112_70 = arith.constant 112 : index
    %c256_71 = arith.constant 256 : index
    %119 = vector.load %arg7[%c112_70, %c256_71] : memref<144x512xbf16, #tpu.memory_space<vmem>>, vector<16x256xbf16>
    tpu.vector_store %arg7[%c112_70, %c256_71], %118 {strides = array<i32>} : memref<144x512xbf16, #tpu.memory_space<vmem>>, vector<16x256xbf16>,
    %c0_72 = arith.constant 0 : index
    %c145 = arith.constant 145 : index
    %120 = vector.load %arg6[%c0_72, %c145] : memref<16x896xf32, #tpu.memory_space<vmem>>, vector<16x256xf32>
    %cst_73 = arith.constant 0.000000e+00 : f32
    %121 = vector.shape_cast %31 : vector<1x256xi1> to vector<1x256xi1>
    %122 = vector.broadcast %121 : vector<1x256xi1> to vector<16x256xi1>
    %123 = vector.broadcast %cst_73 : f32 to vector<16x256xf32>
    %124 = arith.select %122, %120, %123 : vector<16x256xi1>, vector<16x256xf32>
    %125 = arith.truncf %124 : vector<16x256xf32> to vector<16x256xbf16>
    %c128_74 = arith.constant 128 : index
    %c0_75 = arith.constant 0 : index
    %126 = vector.load %arg7[%c128_74, %c0_75] : memref<144x512xbf16, #tpu.memory_space<vmem>>, vector<16x256xbf16>
    tpu.vector_store %arg7[%c128_74, %c0_75], %125 {strides = array<i32>} : memref<144x512xbf16, #tpu.memory_space<vmem>>, vector<16x256xbf16>,
    %c0_76 = arith.constant 0 : index
    %c529 = arith.constant 529 : index
    %127 = vector.load %arg6[%c0_76, %c529] : memref<16x896xf32, #tpu.memory_space<vmem>>, vector<16x256xf32>
    %cst_77 = arith.constant 0.000000e+00 : f32
    %128 = vector.shape_cast %31 : vector<1x256xi1> to vector<1x256xi1>
    %129 = vector.broadcast %128 : vector<1x256xi1> to vector<16x256xi1>
    %130 = vector.broadcast %cst_77 : f32 to vector<16x256xf32>
    %131 = arith.select %129, %127, %130 : vector<16x256xi1>, vector<16x256xf32>
    %132 = arith.truncf %131 : vector<16x256xf32> to vector<16x256xbf16>
    %c128_78 = arith.constant 128 : index
    %c256_79 = arith.constant 256 : index
    %133 = vector.load %arg7[%c128_78, %c256_79] : memref<144x512xbf16, #tpu.memory_space<vmem>>, vector<16x256xbf16>
    tpu.vector_store %arg7[%c128_78, %c256_79], %132 {strides = array<i32>} : memref<144x512xbf16, #tpu.memory_space<vmem>>, vector<16x256xbf16>,
    %c0_80 = arith.constant 0 : index
    %c0_81 = arith.constant 0 : index
    %134 = vector.load %arg4[%c0_80, %c0_81] : memref<32x144xbf16, #tpu.memory_space<vmem>>, vector<32x144xbf16>
    %c0_82 = arith.constant 0 : index
    %c0_83 = arith.constant 0 : index
    %135 = vector.load %arg7[%c0_82, %c0_83] : memref<144x512xbf16, #tpu.memory_space<vmem>>, vector<144x512xbf16>
    %cst_84 = arith.constant dense<0.000000e+00> : vector<32x512xf32>
    %136 = tpu.matmul %134, %135, %cst_84 {dimension_numbers = #tpu.dot_dimension_numbers<[1], [0], [0], [1], [0, 0, 1, 1], [], []>} : vector<32x144xbf16>, vector<144x512xbf16>, vector<32x512xf32> -> vector<32x512xf32>
    %137 = vector.extract_strided_slice %136 {offsets = [0, 0], sizes = [24, 512], strides = [1, 1]} : vector<32x512xf32> to vector<24x512xf32>
    %cst_85 = arith.constant 5.000000e-01 : f32
    %138 = vector.broadcast %cst_85 : f32 to vector<24x512xf32>
    %139 = arith.mulf %138, %137 : vector<24x512xf32>
    %140 = math.tanh %139 : vector<24x512xf32>
    %cst_86 = arith.constant 5.000000e-01 : f32
    %141 = vector.broadcast %cst_86 : f32 to vector<24x512xf32>
    %142 = arith.mulf %141, %140 : vector<24x512xf32>
    %cst_87 = arith.constant 5.000000e-01 : f32
    %143 = vector.broadcast %cst_87 : f32 to vector<24x512xf32>
    %144 = arith.addf %142, %143 : vector<24x512xf32>
    %145 = vector.extract_strided_slice %136 {offsets = [24, 0], sizes = [8, 512], strides = [1, 1]} : vector<32x512xf32> to vector<8x512xf32>
    %146 = math.tanh %145 : vector<8x512xf32>
    %147 = vector.extract_strided_slice %144 {offsets = [0, 0], sizes = [8, 256], strides = [1, 1]} : vector<24x512xf32> to vector<8x256xf32>
    %148 = vector.extract_strided_slice %144 {offsets = [8, 0], sizes = [8, 256], strides = [1, 1]} : vector<24x512xf32> to vector<8x256xf32>
    %149 = vector.extract_strided_slice %144 {offsets = [16, 0], sizes = [8, 256], strides = [1, 1]} : vector<24x512xf32> to vector<8x256xf32>
    %150 = vector.extract_strided_slice %146 {offsets = [0, 0], sizes = [8, 256], strides = [1, 1]} : vector<8x512xf32> to vector<8x256xf32>
    %c0_88 = arith.constant 0 : index
    %c0_89 = arith.constant 0 : index
    %c0_90 = arith.constant 0 : index
    %151 = vector.load %arg3[%c0_88, %c0_89, %c0_90] : memref<2x8x256xf32, #tpu.memory_space<vmem>>, vector<1x8x256xf32>
    %152 = vector.shape_cast %151 : vector<1x8x256xf32> to vector<8x256xf32>
    %153 = arith.mulf %148, %152 : vector<8x256xf32>
    %154 = arith.mulf %147, %150 : vector<8x256xf32>
    %155 = arith.addf %153, %154 : vector<8x256xf32>
    %156 = math.tanh %155 : vector<8x256xf32>
    %157 = arith.mulf %149, %156 : vector<8x256xf32>
    %c0_91 = arith.constant 0 : index
    %c0_92 = arith.constant 0 : index
    %c0_93 = arith.constant 0 : index
    %158 = vector.load %arg5[%c0_91, %c0_92, %c0_93] : memref<2x48x256xf32, #tpu.memory_space<vmem>>, vector<1x8x256xf32>
    %159 = vector.shape_cast %158 : vector<1x8x256xf32> to vector<8x256xf32>
    %160 = vector.shape_cast %157 : vector<8x256xf32> to vector<1x8x256xf32>
    tpu.vector_store %arg5[%c0_91, %c0_92, %c0_93], %160 {strides = array<i32>} : memref<2x48x256xf32, #tpu.memory_space<vmem>>, vector<1x8x256xf32>,
    %c0_94 = arith.constant 0 : index
    %c8_95 = arith.constant 8 : index
    %c0_96 = arith.constant 0 : index
    %161 = vector.load %arg5[%c0_94, %c8_95, %c0_96] : memref<2x48x256xf32, #tpu.memory_space<vmem>>, vector<1x8x256xf32>
    %162 = vector.shape_cast %161 : vector<1x8x256xf32> to vector<8x256xf32>
    %163 = vector.shape_cast %155 : vector<8x256xf32> to vector<1x8x256xf32>
    tpu.vector_store %arg5[%c0_94, %c8_95, %c0_96], %163 {strides = array<i32>} : memref<2x48x256xf32, #tpu.memory_space<vmem>>, vector<1x8x256xf32>,
    %164 = vector.extract_strided_slice %144 {offsets = [0, 0], sizes = [24, 256], strides = [1, 1]} : vector<24x512xf32> to vector<24x256xf32>
    %c0_97 = arith.constant 0 : index
    %c16_98 = arith.constant 16 : index
    %c0_99 = arith.constant 0 : index
    %165 = vector.load %arg5[%c0_97, %c16_98, %c0_99] : memref<2x48x256xf32, #tpu.memory_space<vmem>>, vector<1x24x256xf32>
    %166 = vector.shape_cast %165 : vector<1x24x256xf32> to vector<24x256xf32>
    %167 = vector.shape_cast %164 : vector<24x256xf32> to vector<1x24x256xf32>
    tpu.vector_store %arg5[%c0_97, %c16_98, %c0_99], %167 {strides = array<i32>} : memref<2x48x256xf32, #tpu.memory_space<vmem>>, vector<1x24x256xf32>,
    %c0_100 = arith.constant 0 : index
    %c40 = arith.constant 40 : index
    %c0_101 = arith.constant 0 : index
    %168 = vector.load %arg5[%c0_100, %c40, %c0_101] : memref<2x48x256xf32, #tpu.memory_space<vmem>>, vector<1x8x256xf32>
    %169 = vector.shape_cast %168 : vector<1x8x256xf32> to vector<8x256xf32>
    %170 = vector.shape_cast %150 : vector<8x256xf32> to vector<1x8x256xf32>
    tpu.vector_store %arg5[%c0_100, %c40, %c0_101], %170 {strides = array<i32>} : memref<2x48x256xf32, #tpu.memory_space<vmem>>, vector<1x8x256xf32>,
    %171 = vector.extract_strided_slice %144 {offsets = [0, 256], sizes = [8, 256], strides = [1, 1]} : vector<24x512xf32> to vector<8x256xf32>
    %172 = vector.extract_strided_slice %144 {offsets = [8, 256], sizes = [8, 256], strides = [1, 1]} : vector<24x512xf32> to vector<8x256xf32>
    %173 = vector.extract_strided_slice %144 {offsets = [16, 256], sizes = [8, 256], strides = [1, 1]} : vector<24x512xf32> to vector<8x256xf32>
    %174 = vector.extract_strided_slice %146 {offsets = [0, 256], sizes = [8, 256], strides = [1, 1]} : vector<8x512xf32> to vector<8x256xf32>
    %c1_102 = arith.constant 1 : index
    %c0_103 = arith.constant 0 : index
    %c0_104 = arith.constant 0 : index
    %175 = vector.load %arg3[%c1_102, %c0_103, %c0_104] : memref<2x8x256xf32, #tpu.memory_space<vmem>>, vector<1x8x256xf32>
    %176 = vector.shape_cast %175 : vector<1x8x256xf32> to vector<8x256xf32>
    %177 = arith.mulf %172, %176 : vector<8x256xf32>
    %178 = arith.mulf %171, %174 : vector<8x256xf32>
    %179 = arith.addf %177, %178 : vector<8x256xf32>
    %180 = math.tanh %179 : vector<8x256xf32>
    %181 = arith.mulf %173, %180 : vector<8x256xf32>
    %c1_105 = arith.constant 1 : index
    %c0_106 = arith.constant 0 : index
    %c0_107 = arith.constant 0 : index
    %182 = vector.load %arg5[%c1_105, %c0_106, %c0_107] : memref<2x48x256xf32, #tpu.memory_space<vmem>>, vector<1x8x256xf32>
    %183 = vector.shape_cast %182 : vector<1x8x256xf32> to vector<8x256xf32>
    %184 = vector.shape_cast %181 : vector<8x256xf32> to vector<1x8x256xf32>
    tpu.vector_store %arg5[%c1_105, %c0_106, %c0_107], %184 {strides = array<i32>} : memref<2x48x256xf32, #tpu.memory_space<vmem>>, vector<1x8x256xf32>,
    %c1_108 = arith.constant 1 : index
    %c8_109 = arith.constant 8 : index
    %c0_110 = arith.constant 0 : index
    %185 = vector.load %arg5[%c1_108, %c8_109, %c0_110] : memref<2x48x256xf32, #tpu.memory_space<vmem>>, vector<1x8x256xf32>
    %186 = vector.shape_cast %185 : vector<1x8x256xf32> to vector<8x256xf32>
    %187 = vector.shape_cast %179 : vector<8x256xf32> to vector<1x8x256xf32>
    tpu.vector_store %arg5[%c1_108, %c8_109, %c0_110], %187 {strides = array<i32>} : memref<2x48x256xf32, #tpu.memory_space<vmem>>, vector<1x8x256xf32>,
    %188 = vector.extract_strided_slice %144 {offsets = [0, 256], sizes = [24, 256], strides = [1, 1]} : vector<24x512xf32> to vector<24x256xf32>
    %c1_111 = arith.constant 1 : index
    %c16_112 = arith.constant 16 : index
    %c0_113 = arith.constant 0 : index
    %189 = vector.load %arg5[%c1_111, %c16_112, %c0_113] : memref<2x48x256xf32, #tpu.memory_space<vmem>>, vector<1x24x256xf32>
    %190 = vector.shape_cast %189 : vector<1x24x256xf32> to vector<24x256xf32>
    %191 = vector.shape_cast %188 : vector<24x256xf32> to vector<1x24x256xf32>
    tpu.vector_store %arg5[%c1_111, %c16_112, %c0_113], %191 {strides = array<i32>} : memref<2x48x256xf32, #tpu.memory_space<vmem>>, vector<1x24x256xf32>,
    %c1_114 = arith.constant 1 : index
    %c40_115 = arith.constant 40 : index
    %c0_116 = arith.constant 0 : index
    %192 = vector.load %arg5[%c1_114, %c40_115, %c0_116] : memref<2x48x256xf32, #tpu.memory_space<vmem>>, vector<1x8x256xf32>
    %193 = vector.shape_cast %192 : vector<1x8x256xf32> to vector<8x256xf32>
    %194 = vector.shape_cast %174 : vector<8x256xf32> to vector<1x8x256xf32>
    tpu.vector_store %arg5[%c1_114, %c40_115, %c0_116], %194 {strides = array<i32>} : memref<2x48x256xf32, #tpu.memory_space<vmem>>, vector<1x8x256xf32>,
    return
  }
  func.func @transform_0(%arg0: i32) -> (i32, i32, i32) {
    %c0_i32 = arith.constant 0 : i32
    %c0_i32_0 = arith.constant 0 : i32
    %c0_i32_1 = arith.constant 0 : i32
    %c0_i32_2 = arith.constant 0 : i32
    return %c0_i32, %c0_i32_0, %c0_i32_1 : i32, i32, i32
  }
  func.func @transform_1(%arg0: i32) -> (i32, i32, i32) {
    %c0_i32 = arith.constant 0 : i32
    %c0_i32_0 = arith.constant 0 : i32
    %c0_i32_1 = arith.constant 0 : i32
    %c0_i32_2 = arith.constant 0 : i32
    return %c0_i32, %c0_i32_0, %c0_i32_1 : i32, i32, i32
  }
  func.func @transform_2(%arg0: i32) -> (i32, i32, i32) {
    %c0_i32 = arith.constant 0 : i32
    %c0_i32_0 = arith.constant 0 : i32
    %c0_i32_1 = arith.constant 0 : i32
    %c0_i32_2 = arith.constant 0 : i32
    return %c0_i32, %c0_i32_0, %c0_i32_1 : i32, i32, i32
  }
  func.func @transform_3(%arg0: i32) -> (i32, i32) {
    %c0_i32 = arith.constant 0 : i32
    %c0_i32_0 = arith.constant 0 : i32
    %c0_i32_1 = arith.constant 0 : i32
    return %c0_i32, %c0_i32_0 : i32, i32
  }
  func.func @transform_4(%arg0: i32) -> (i32, i32, i32) {
    %c0_i32 = arith.constant 0 : i32
    %c0_i32_0 = arith.constant 0 : i32
    %c0_i32_1 = arith.constant 0 : i32
    %c0_i32_2 = arith.constant 0 : i32
    return %c0_i32, %c0_i32_0, %c0_i32_1 : i32, i32, i32
  }
}

</mosaic_0001>

<llo_original>
// kernel: tpu_custom_call.1
$region0: #{tpu_custom_call.1}
  #allocation0 [shape = 'u32[]', space=smem, size = 0x4, offset = 0x4, fixed_abs, tag = 'smem constant byte address 0x4 - core index']
  #allocation1 [shape = 'u32[144,128]{1,0:T(1,128)}', space=vmem, size = 0x12000, scoped, tag = 'internal scratch']
  #allocation2 [shape = 'f32[16,896]{1,0:T(8,128)}', space=vmem, size = 0xe000, scoped, tag = 'scratch operand']
  #allocation3 [shape = 'bf16[144,512]{1,0:T(16,128)(2,1)}', space=vmem, size = 0x24000, scoped, tag = 'scratch operand']
  %s0 = inlined_call_operand.hbm [shape: f32[2,4,256], index: 0, kind: input, shape index: {}]
  %s1 = inlined_call_operand.hbm [shape: f32[2,8,256], index: 1, kind: input, shape index: {}]
  %s2 = inlined_call_operand.hbm [shape: f32[2,8,256], index: 2, kind: input, shape index: {}]
  %s3 = inlined_call_operand.hbm [shape: bf16[32,144], index: 3, kind: input, shape index: {}]
  %s4 = inlined_call_operand.hbm [shape: f32[2,48,256], index: 4, kind: output, shape index: {}]
  %s5 = sld [smem:[#allocation0]]
  $region42: #{tpu_custom_call.1} parent=0
    _
  %s7 = ssub.s32 1, %s5
  %s8 = scalar_select 0, %s7, %s5
  $region1: #{tpu_custom_call.1} parent=0
    #allocation4 [shape = 'u8[8192]{0}', space=vmem, size = 0x2000, scoped, tag = 'input window, operand 0, single buffered']
    #allocation5 [shape = 's32[1]{0}', space=sflag, size = 0x4, scoped, tag = 'scoped memory for tpu_custom_call.1']
    #allocation6 [shape = 's32[1]{0}', space=sflag, size = 0x4, scoped, tag = 'scoped memory for tpu_custom_call.1']
    #allocation7 [shape = 'u8[16384]{0}', space=vmem, size = 0x4000, scoped, tag = 'input window, operand 1, single buffered']
    #allocation8 [shape = 's32[1]{0}', space=sflag, size = 0x4, scoped, tag = 'scoped memory for tpu_custom_call.1']
    #allocation9 [shape = 'u8[16384]{0}', space=vmem, size = 0x4000, scoped, tag = 'input window, operand 2, single buffered']
    #allocation10 [shape = 'u8[16384]{0}', space=vmem, size = 0x4000, scoped, tag = 'input window, operand 3, single buffered']
    #allocation11 [shape = 's32[1]{0}', space=sflag, size = 0x4, scoped, tag = 'scoped memory for tpu_custom_call.1']
    #allocation12 [shape = 'u8[98304]{0}', space=vmem, size = 0x18000, scoped, tag = 'output window, operand 0, single buffered']
    %9 = vsyncpa [#allocation5], 0
    %10 = vsyncpa [#allocation8], 0
    %11 = vsyncpa [#allocation11], 0
    %12 = vsyncpa [#allocation6], 0
    // Predicated region
    $region2: #{tpu_custom_call.1} parent=1 // pred_check
      _
    $region3: #{tpu_custom_call.1} parent=1 // pred_check_branch
      %14 = sbr.rel (0) target = $region5
    $region4: #{tpu_custom_call.1} parent=1 // pred_region
      %s16 = ssub.s32 256, 256
      %17 = vsyncadd [#allocation5], %s16
      %s18 = sshll.u32 [#allocation4], 4
      %s19 = int_to_ptr.vmem [resolvable:$true] %s18
      %24 = dma.hbm_to_vmem [thread:$0]  %s0, 256, %s19, [#allocation5], 128, 128, 8
    $region5: #{tpu_custom_call.1} parent=1 // pred_fallthru
      _
    // Predicated region
    $region6: #{tpu_custom_call.1} parent=1 // pred_check
      _
    $region7: #{tpu_custom_call.1} parent=1 // pred_check_branch
      %26 = sbr.rel (0) target = $region9
    $region8: #{tpu_custom_call.1} parent=1 // pred_region
      %s28 = ssub.s32 512, 512
      %29 = vsyncadd [#allocation8], %s28
      %s30 = sshll.u32 [#allocation7], 4
      %s31 = int_to_ptr.vmem [resolvable:$true] %s30
      %36 = dma.hbm_to_vmem [thread:$0]  %s1, 512, %s31, [#allocation8], 256, 256, 16
    $region9: #{tpu_custom_call.1} parent=1 // pred_fallthru
      _
    // Predicated region
    $region10: #{tpu_custom_call.1} parent=1 // pred_check
      _
    $region11: #{tpu_custom_call.1} parent=1 // pred_check_branch
      %38 = sbr.rel (0) target = $region13
    $region12: #{tpu_custom_call.1} parent=1 // pred_region
      %s40 = ssub.s32 512, 512
      %41 = vsyncadd [#allocation8], %s40
      %s42 = sshll.u32 [#allocation9], 4
      %s43 = int_to_ptr.vmem [resolvable:$true] %s42
      %48 = dma.hbm_to_vmem [thread:$0]  %s2, 512, %s43, [#allocation8], 256, 256, 16
    $region13: #{tpu_custom_call.1} parent=1 // pred_fallthru
      _
    // Predicated region
    $region14: #{tpu_custom_call.1} parent=1 // pred_check
      _
    $region15: #{tpu_custom_call.1} parent=1 // pred_check_branch
      %50 = sbr.rel (0) target = $region17
    $region16: #{tpu_custom_call.1} parent=1 // pred_region
      %s52 = ssub.s32 512, 512
      %53 = vsyncadd [#allocation11], %s52
      %s54 = sshll.u32 [#allocation10], 4
      %s55 = int_to_ptr.vmem [resolvable:$true] %s54
      %60 = dma.hbm_to_vmem [thread:$0]  %s3, 512, %s55, [#allocation11], 128, 128, 8
    $region17: #{tpu_custom_call.1} parent=1 // pred_fallthru
      _
    // Predicated region
    $region18: #{tpu_custom_call.1} parent=1 // pred_check
      _
    $region19: #{tpu_custom_call.1} parent=1 // pred_check_branch
      %62 = sbr.rel (0) target = $region21
    $region20: #{tpu_custom_call.1} parent=1 // pred_region
      %63 = dma.done [#allocation5], 256
    $region21: #{tpu_custom_call.1} parent=1 // pred_fallthru
      _
    // Predicated region
    $region22: #{tpu_custom_call.1} parent=1 // pred_check
      _
    $region23: #{tpu_custom_call.1} parent=1 // pred_check_branch
      %65 = sbr.rel (0) target = $region25
    $region24: #{tpu_custom_call.1} parent=1 // pred_region
      %66 = dma.done [#allocation8], 512
    $region25: #{tpu_custom_call.1} parent=1 // pred_fallthru
      _
    // Predicated region
    $region26: #{tpu_custom_call.1} parent=1 // pred_check
      _
    $region27: #{tpu_custom_call.1} parent=1 // pred_check_branch
      %68 = sbr.rel (0) target = $region29
    $region28: #{tpu_custom_call.1} parent=1 // pred_region
      %69 = dma.done [#allocation8], 512
    $region29: #{tpu_custom_call.1} parent=1 // pred_fallthru
      _
    // Predicated region
    $region30: #{tpu_custom_call.1} parent=1 // pred_check
      _
    $region31: #{tpu_custom_call.1} parent=1 // pred_check_branch
      %71 = sbr.rel (0) target = $region33
    $region32: #{tpu_custom_call.1} parent=1 // pred_region
      %72 = dma.done [#allocation11], 512
    $region33: #{tpu_custom_call.1} parent=1 // pred_fallthru
      _
    %v74 = vlaneseq
    %v75 = vshrl.u32 %v74, 7
    %v76 = vadd.s32 %v75, 8
    %vm77 = vcmp.eq.s32.totalorder %v75, 4
    %vm78 = vcmp.eq.s32.totalorder %v76, 4
    %v79 = vsel %vm77, 1.0, 0.0
    %v80 = vsel %vm78, 1.0, 0.0
    %81 = vst [vmem:[#allocation2] sm:$0xff] %v79
    %82 = vst [vmem:[#allocation2 + $0x8] sm:$0xff] %v79
    %83 = vst [vmem:[#allocation2 + $0x10] sm:$0xff] %v79
    %84 = vst [vmem:[#allocation2 + $0x18] sm:$0xff] %v79
    %85 = vst [vmem:[#allocation2 + $0x20] sm:$0xff] %v79
    %86 = vst [vmem:[#allocation2 + $0x28] sm:$0xff] %v79
    %87 = vst [vmem:[#allocation2 + $0x30] sm:$0xff] %v79
    %88 = vst [vmem:[#allocation2 + $0x38] sm:$0xff] %v80
    %89 = vst [vmem:[#allocation2 + $0x40] sm:$0xff] %v80
    %90 = vst [vmem:[#allocation2 + $0x48] sm:$0xff] %v80
    %91 = vst [vmem:[#allocation2 + $0x50] sm:$0xff] %v80
    %92 = vst [vmem:[#allocation2 + $0x58] sm:$0xff] %v80
    %93 = vst [vmem:[#allocation2 + $0x60] sm:$0xff] %v80
    %94 = vst [vmem:[#allocation2 + $0x68] sm:$0xff] %v80
    %v95 = vld [vmem:[#allocation4] sm:$0xff]
    %v97 = vcombine.high %v95, %v95
    %99 = vst [vmem:[#allocation2 + $0x8] sm:$0xf] %v95
    %100 = vst [vmem:[#allocation2 + $0x10] sm:$0xf] %v97
    %v101 = vld [vmem:[#allocation7] sm:$0xff]
    %v102 = vld [vmem:[#allocation7 + $0x8] sm:$0xff]
    %103 = vst [vmem:[#allocation2 + $0x40] sm:$0xff] %v101
    %104 = vst [vmem:[#allocation2 + $0x48] sm:$0xff] %v102
    %s105 = scalar_lea.vmem [#allocation4], 8
    %v106 = vld [vmem:[%s105] sm:$0xff]
    %v108 = vcombine.high %v106, %v106
    %110 = vst [vmem:[#allocation2 + $0x20] sm:$0xf] %v106
    %111 = vst [vmem:[#allocation2 + $0x28] sm:$0xf] %v108
    %s112 = scalar_lea.vmem [#allocation7], 16
    %v113 = vld [vmem:[%s112] sm:$0xff]
    %v114 = vld [vmem:[%s112 + $0x8] sm:$0xff]
    %115 = vst [vmem:[#allocation2 + $0x58] sm:$0xff] %v113
    %116 = vst [vmem:[#allocation2 + $0x60] sm:$0xff] %v114
    %v117 = vlaneseq
    %v118 = vand.u32 %v117, 127
    %v119 = vadd.s32 %v118, 128
    %v120 = vand.u32 %v118, 15
    %v121 = vand.u32 %v119, 15
    %vm122 = vcmp.ge.s32.totalorder %v120, 1
    %vm123 = vcmp.ge.s32.totalorder %v121, 1
    %vm124 = vcmp.lt.s32.totalorder %v120, 17
    %vm125 = vcmp.lt.s32.totalorder %v121, 17
    %vm126 = vmand %vm122, %vm124
    %vm127 = vmand %vm123, %vm125
    %vm128 = vcmp.ge.s32.totalorder %v120, 4294967295
    %vm129 = vcmp.ge.s32.totalorder %v121, 4294967295
    %vm130 = vcmp.lt.s32.totalorder %v120, 15
    %vm131 = vcmp.lt.s32.totalorder %v121, 15
    %vm132 = vmand %vm128, %vm130
    %vm133 = vmand %vm129, %vm131
    %v134 = vld [vmem:[#allocation2] sm:$0xff]
    %v135 = vld [vmem:[#allocation2 + $0x8] sm:$0xff]
    %v136 = vld [vmem:[#allocation2 + $0x10] sm:$0xff]
    %v137 = vld [vmem:[#allocation2 + $0x38] sm:$0xff]
    %v138 = vld [vmem:[#allocation2 + $0x40] sm:$0xff]
    %v139 = vld [vmem:[#allocation2 + $0x48] sm:$0xff]
    %v140 = vsel %vm126, 1, 0
    %v141 = vsel %vm127, 1, 0
    %vm142 = vcmp.eq.s32.totalorder %v140, 1
    %vm143 = vcmp.eq.s32.totalorder %v141, 1
    %150 = vrot.lane.b32.xlu0 %v134, 17
    %v151 = vpop.permute.xlu0 %150
    %152 = vrot.lane.b32.xlu0 %v135, 17
    %v153 = vpop.permute.xlu0 %152
    %154 = vrot.lane.b32.xlu0 %v136, 17
    %v155 = vpop.permute.xlu0 %154
    %156 = vrot.lane.b32.xlu0 %v137, 17
    %v157 = vpop.permute.xlu0 %156
    %158 = vrot.lane.b32.xlu0 %v138, 17
    %v159 = vpop.permute.xlu0 %158
    %160 = vrot.lane.b32.xlu0 %v139, 17
    %v161 = vpop.permute.xlu0 %160
    %vm162 = vcmask 138240
    %v163 = vsel %vm162, %v151, %v153
    %v164 = vsel %vm162, %v153, %v155
    %v165 = vsel %vm162, %v157, %v159
    %v166 = vsel %vm162, %v159, %v161
    %v171 = vsel %vm142, %v163, 0.0
    %v172 = vsel %vm143, %v164, 0.0
    %v173 = vsel %vm142, %v165, 0.0
    %v174 = vsel %vm143, %v166, 0.0
    %v175 = vpack.c.bf16 %v173, %v171
    %v176 = vpack.c.bf16 %v174, %v172
    %177 = vst [vmem:[#allocation3] sm:$0xff] %v175
    %178 = vst [vmem:[#allocation3 + $0x8] sm:$0xff] %v176
    %v179 = vld [vmem:[#allocation2 + $0x18] sm:$0xff]
    %v180 = vld [vmem:[#allocation2 + $0x20] sm:$0xff]
    %v181 = vld [vmem:[#allocation2 + $0x28] sm:$0xff]
    %v182 = vld [vmem:[#allocation2 + $0x50] sm:$0xff]
    %v183 = vld [vmem:[#allocation2 + $0x58] sm:$0xff]
    %v184 = vld [vmem:[#allocation2 + $0x60] sm:$0xff]
    %191 = vrot.lane.b32.xlu0 %v179, 17
    %v192 = vpop.permute.xlu0 %191
    %193 = vrot.lane.b32.xlu0 %v180, 17
    %v194 = vpop.permute.xlu0 %193
    %195 = vrot.lane.b32.xlu0 %v181, 17
    %v196 = vpop.permute.xlu0 %195
    %197 = vrot.lane.b32.xlu0 %v182, 17
    %v198 = vpop.permute.xlu0 %197
    %199 = vrot.lane.b32.xlu0 %v183, 17
    %v200 = vpop.permute.xlu0 %199
    %201 = vrot.lane.b32.xlu0 %v184, 17
    %v202 = vpop.permute.xlu0 %201
    %v203 = vsel %vm162, %v192, %v194
    %v204 = vsel %vm162, %v194, %v196
    %v205 = vsel %vm162, %v198, %v200
    %v206 = vsel %vm162, %v200, %v202
    %v211 = vsel %vm142, %v203, 0.0
    %v212 = vsel %vm143, %v204, 0.0
    %v213 = vsel %vm142, %v205, 0.0
    %v214 = vsel %vm143, %v206, 0.0
    %v215 = vpack.c.bf16 %v213, %v211
    %v216 = vpack.c.bf16 %v214, %v212
    %217 = vst [vmem:[#allocation3 + $0x10] sm:$0xff] %v215
    %218 = vst [vmem:[#allocation3 + $0x18] sm:$0xff] %v216
    %v219 = vld [vmem:[#allocation2] sm:$0xff]
    %v220 = vld [vmem:[#allocation2 + $0x8] sm:$0xff]
    %v221 = vld [vmem:[#allocation2 + $0x10] sm:$0xff]
    %v222 = vld [vmem:[#allocation2 + $0x38] sm:$0xff]
    %v223 = vld [vmem:[#allocation2 + $0x40] sm:$0xff]
    %v224 = vld [vmem:[#allocation2 + $0x48] sm:$0xff]
    %v225 = vpack.c.bf16 %v222, %v219
    %v226 = vpack.c.bf16 %v223, %v220
    %v227 = vpack.c.bf16 %v224, %v221
    %231 = vrot.lane.b32.xlu0 %v225, 16
    %v232 = vpop.permute.xlu0 %231
    %233 = vrot.lane.b32.xlu0 %v226, 16
    %v234 = vpop.permute.xlu0 %233
    %235 = vrot.lane.b32.xlu0 %v227, 16
    %v236 = vpop.permute.xlu0 %235
    %vm237 = vcmask 130048
    %v238 = vsel %vm237, %v232, %v234
    %v239 = vsel %vm237, %v234, %v236
    %242 = vst [vmem:[#allocation3 + $0x20] sm:$0xff] %v238
    %243 = vst [vmem:[#allocation3 + $0x28] sm:$0xff] %v239
    %v244 = vld [vmem:[#allocation2 + $0x18] sm:$0xff]
    %v245 = vld [vmem:[#allocation2 + $0x20] sm:$0xff]
    %v246 = vld [vmem:[#allocation2 + $0x28] sm:$0xff]
    %v247 = vld [vmem:[#allocation2 + $0x50] sm:$0xff]
    %v248 = vld [vmem:[#allocation2 + $0x58] sm:$0xff]
    %v249 = vld [vmem:[#allocation2 + $0x60] sm:$0xff]
    %v250 = vpack.c.bf16 %v247, %v244
    %v251 = vpack.c.bf16 %v248, %v245
    %v252 = vpack.c.bf16 %v249, %v246
    %256 = vrot.lane.b32.xlu0 %v250, 16
    %v257 = vpop.permute.xlu0 %256
    %258 = vrot.lane.b32.xlu0 %v251, 16
    %v259 = vpop.permute.xlu0 %258
    %260 = vrot.lane.b32.xlu0 %v252, 16
    %v261 = vpop.permute.xlu0 %260
    %v262 = vsel %vm237, %v257, %v259
    %v263 = vsel %vm237, %v259, %v261
    %266 = vst [vmem:[#allocation3 + $0x30] sm:$0xff] %v262
    %267 = vst [vmem:[#allocation3 + $0x38] sm:$0xff] %v263
    %v268 = vld [vmem:[#allocation2] sm:$0xff]
    %v269 = vld [vmem:[#allocation2 + $0x8] sm:$0xff]
    %v270 = vld [vmem:[#allocation2 + $0x10] sm:$0xff]
    %v271 = vld [vmem:[#allocation2 + $0x38] sm:$0xff]
    %v272 = vld [vmem:[#allocation2 + $0x40] sm:$0xff]
    %v273 = vld [vmem:[#allocation2 + $0x48] sm:$0xff]
    %v274 = vsel %vm132, 1, 0
    %v275 = vsel %vm133, 1, 0
    %vm276 = vcmp.eq.s32.totalorder %v274, 1
    %vm277 = vcmp.eq.s32.totalorder %v275, 1
    %284 = vrot.lane.b32.xlu0 %v268, 15
    %v285 = vpop.permute.xlu0 %284
    %286 = vrot.lane.b32.xlu0 %v269, 15
    %v287 = vpop.permute.xlu0 %286
    %288 = vrot.lane.b32.xlu0 %v270, 15
    %v289 = vpop.permute.xlu0 %288
    %290 = vrot.lane.b32.xlu0 %v271, 15
    %v291 = vpop.permute.xlu0 %290
    %292 = vrot.lane.b32.xlu0 %v272, 15
    %v293 = vpop.permute.xlu0 %292
    %294 = vrot.lane.b32.xlu0 %v273, 15
    %v295 = vpop.permute.xlu0 %294
    %vm296 = vcmask 121856
    %v297 = vsel %vm296, %v285, %v287
    %v298 = vsel %vm296, %v287, %v289
    %v299 = vsel %vm296, %v291, %v293
    %v300 = vsel %vm296, %v293, %v295
    %v305 = vsel %vm276, %v297, 0.0
    %v306 = vsel %vm277, %v298, 0.0
    %v307 = vsel %vm276, %v299, 0.0
    %v308 = vsel %vm277, %v300, 0.0
    %v309 = vpack.c.bf16 %v307, %v305
    %v310 = vpack.c.bf16 %v308, %v306
    %311 = vst [vmem:[#allocation3 + $0x40] sm:$0xff] %v309
    %312 = vst [vmem:[#allocation3 + $0x48] sm:$0xff] %v310
    %v313 = vld [vmem:[#allocation2 + $0x18] sm:$0xff]
    %v314 = vld [vmem:[#allocation2 + $0x20] sm:$0xff]
    %v315 = vld [vmem:[#allocation2 + $0x28] sm:$0xff]
    %v316 = vld [vmem:[#allocation2 + $0x50] sm:$0xff]
    %v317 = vld [vmem:[#allocation2 + $0x58] sm:$0xff]
    %v318 = vld [vmem:[#allocation2 + $0x60] sm:$0xff]
    %325 = vrot.lane.b32.xlu0 %v313, 15
    %v326 = vpop.permute.xlu0 %325
    %327 = vrot.lane.b32.xlu0 %v314, 15
    %v328 = vpop.permute.xlu0 %327
    %329 = vrot.lane.b32.xlu0 %v315, 15
    %v330 = vpop.permute.xlu0 %329
    %331 = vrot.lane.b32.xlu0 %v316, 15
    %v332 = vpop.permute.xlu0 %331
    %333 = vrot.lane.b32.xlu0 %v317, 15
    %v334 = vpop.permute.xlu0 %333
    %335 = vrot.lane.b32.xlu0 %v318, 15
    %v336 = vpop.permute.xlu0 %335
    %v337 = vsel %vm296, %v326, %v328
    %v338 = vsel %vm296, %v328, %v330
    %v339 = vsel %vm296, %v332, %v334
    %v340 = vsel %vm296, %v334, %v336
    %v345 = vsel %vm276, %v337, 0.0
    %v346 = vsel %vm277, %v338, 0.0
    %v347 = vsel %vm276, %v339, 0.0
    %v348 = vsel %vm277, %v340, 0.0
    %v349 = vpack.c.bf16 %v347, %v345
    %v350 = vpack.c.bf16 %v348, %v346
    %351 = vst [vmem:[#allocation3 + $0x50] sm:$0xff] %v349
    %352 = vst [vmem:[#allocation3 + $0x58] sm:$0xff] %v350
    %v353 = vld [vmem:[#allocation2] sm:$0xff]
    %v354 = vld [vmem:[#allocation2 + $0x8] sm:$0xff]
    %v355 = vld [vmem:[#allocation2 + $0x10] sm:$0xff]
    %v356 = vld [vmem:[#allocation2 + $0x38] sm:$0xff]
    %v357 = vld [vmem:[#allocation2 + $0x40] sm:$0xff]
    %v358 = vld [vmem:[#allocation2 + $0x48] sm:$0xff]
    %365 = vrot.lane.b32.xlu0 %v353, 1
    %v366 = vpop.permute.xlu0 %365
    %367 = vrot.lane.b32.xlu0 %v354, 1
    %v368 = vpop.permute.xlu0 %367
    %369 = vrot.lane.b32.xlu0 %v355, 1
    %v370 = vpop.permute.xlu0 %369
    %371 = vrot.lane.b32.xlu0 %v356, 1
    %v372 = vpop.permute.xlu0 %371
    %373 = vrot.lane.b32.xlu0 %v357, 1
    %v374 = vpop.permute.xlu0 %373
    %375 = vrot.lane.b32.xlu0 %v358, 1
    %v376 = vpop.permute.xlu0 %375
    %vm377 = vcmask 7168
    %v378 = vsel %vm377, %v366, %v368
    %v379 = vsel %vm377, %v368, %v370
    %v380 = vsel %vm377, %v372, %v374
    %v381 = vsel %vm377, %v374, %v376
    %v386 = vsel %vm142, %v378, 0.0
    %v387 = vsel %vm143, %v379, 0.0
    %v388 = vsel %vm142, %v380, 0.0
    %v389 = vsel %vm143, %v381, 0.0
    %v390 = vpack.c.bf16 %v388, %v386
    %v391 = vpack.c.bf16 %v389, %v387
    %392 = vst [vmem:[#allocation3 + $0x60] sm:$0xff] %v390
    %393 = vst [vmem:[#allocation3 + $0x68] sm:$0xff] %v391
    %v394 = vld [vmem:[#allocation2 + $0x18] sm:$0xff]
    %v395 = vld [vmem:[#allocation2 + $0x20] sm:$0xff]
    %v396 = vld [vmem:[#allocation2 + $0x28] sm:$0xff]
    %v397 = vld [vmem:[#allocation2 + $0x50] sm:$0xff]
    %v398 = vld [vmem:[#allocation2 + $0x58] sm:$0xff]
    %v399 = vld [vmem:[#allocation2 + $0x60] sm:$0xff]
    %406 = vrot.lane.b32.xlu0 %v394, 1
    %v407 = vpop.permute.xlu0 %406
    %408 = vrot.lane.b32.xlu0 %v395, 1
    %v409 = vpop.permute.xlu0 %408
    %410 = vrot.lane.b32.xlu0 %v396, 1
    %v411 = vpop.permute.xlu0 %410
    %412 = vrot.lane.b32.xlu0 %v397, 1
    %v413 = vpop.permute.xlu0 %412
    %414 = vrot.lane.b32.xlu0 %v398, 1
    %v415 = vpop.permute.xlu0 %414
    %416 = vrot.lane.b32.xlu0 %v399, 1
    %v417 = vpop.permute.xlu0 %416
    %v418 = vsel %vm377, %v407, %v409
    %v419 = vsel %vm377, %v409, %v411
    %v420 = vsel %vm377, %v413, %v415
    %v421 = vsel %vm377, %v415, %v417
    %v426 = vsel %vm142, %v418, 0.0
    %v427 = vsel %vm143, %v419, 0.0
    %v428 = vsel %vm142, %v420, 0.0
    %v429 = vsel %vm143, %v421, 0.0
    %v430 = vpack.c.bf16 %v428, %v426
    %v431 = vpack.c.bf16 %v429, %v427
    %432 = vst [vmem:[#allocation3 + $0x70] sm:$0xff] %v430
    %433 = vst [vmem:[#allocation3 + $0x78] sm:$0xff] %v431
    %v434 = vld [vmem:[#allocation2 + $0x8] sm:$0xff]
    %v435 = vld [vmem:[#allocation2 + $0x10] sm:$0xff]
    %v436 = vld [vmem:[#allocation2 + $0x40] sm:$0xff]
    %v437 = vld [vmem:[#allocation2 + $0x48] sm:$0xff]
    %v438 = vpack.c.bf16 %v436, %v434
    %v439 = vpack.c.bf16 %v437, %v435
    %440 = vst [vmem:[#allocation3 + $0x80] sm:$0xff] %v438
    %441 = vst [vmem:[#allocation3 + $0x88] sm:$0xff] %v439
    %v442 = vld [vmem:[#allocation2 + $0x20] sm:$0xff]
    %v443 = vld [vmem:[#allocation2 + $0x28] sm:$0xff]
    %v444 = vld [vmem:[#allocation2 + $0x58] sm:$0xff]
    %v445 = vld [vmem:[#allocation2 + $0x60] sm:$0xff]
    %v446 = vpack.c.bf16 %v444, %v442
    %v447 = vpack.c.bf16 %v445, %v443
    %448 = vst [vmem:[#allocation3 + $0x90] sm:$0xff] %v446
    %449 = vst [vmem:[#allocation3 + $0x98] sm:$0xff] %v447
    %v450 = vld [vmem:[#allocation2 + $0x8] sm:$0xff]
    %v451 = vld [vmem:[#allocation2 + $0x10] sm:$0xff]
    %v452 = vld [vmem:[#allocation2 + $0x18] sm:$0xff]
    %v453 = vld [vmem:[#allocation2 + $0x40] sm:$0xff]
    %v454 = vld [vmem:[#allocation2 + $0x48] sm:$0xff]
    %v455 = vld [vmem:[#allocation2 + $0x50] sm:$0xff]
    %462 = vrot.lane.b32.xlu0 %v450, 127
    %v463 = vpop.permute.xlu0 %462
    %464 = vrot.lane.b32.xlu0 %v451, 127
    %v465 = vpop.permute.xlu0 %464
    %466 = vrot.lane.b32.xlu0 %v452, 127
    %v467 = vpop.permute.xlu0 %466
    %468 = vrot.lane.b32.xlu0 %v453, 127
    %v469 = vpop.permute.xlu0 %468
    %470 = vrot.lane.b32.xlu0 %v454, 127
    %v471 = vpop.permute.xlu0 %470
    %472 = vrot.lane.b32.xlu0 %v455, 127
    %v473 = vpop.permute.xlu0 %472
    %vm474 = vcmask 1039360
    %v475 = vsel %vm474, %v463, %v465
    %v476 = vsel %vm474, %v465, %v467
    %v477 = vsel %vm474, %v469, %v471
    %v478 = vsel %vm474, %v471, %v473
    %v483 = vsel %vm276, %v475, 0.0
    %v484 = vsel %vm277, %v476, 0.0
    %v485 = vsel %vm276, %v477, 0.0
    %v486 = vsel %vm277, %v478, 0.0
    %v487 = vpack.c.bf16 %v485, %v483
    %v488 = vpack.c.bf16 %v486, %v484
    %489 = vst [vmem:[#allocation3 + $0xa0] sm:$0xff] %v487
    %490 = vst [vmem:[#allocation3 + $0xa8] sm:$0xff] %v488
    %v491 = vld [vmem:[#allocation2 + $0x20] sm:$0xff]
    %v492 = vld [vmem:[#allocation2 + $0x28] sm:$0xff]
    %v493 = vld [vmem:[#allocation2 + $0x30] sm:$0xff]
    %v494 = vld [vmem:[#allocation2 + $0x58] sm:$0xff]
    %v495 = vld [vmem:[#allocation2 + $0x60] sm:$0xff]
    %v496 = vld [vmem:[#allocation2 + $0x68] sm:$0xff]
    %503 = vrot.lane.b32.xlu0 %v491, 127
    %v504 = vpop.permute.xlu0 %503
    %505 = vrot.lane.b32.xlu0 %v492, 127
    %v506 = vpop.permute.xlu0 %505
    %507 = vrot.lane.b32.xlu0 %v493, 127
    %v508 = vpop.permute.xlu0 %507
    %509 = vrot.lane.b32.xlu0 %v494, 127
    %v510 = vpop.permute.xlu0 %509
    %511 = vrot.lane.b32.xlu0 %v495, 127
    %v512 = vpop.permute.xlu0 %511
    %513 = vrot.lane.b32.xlu0 %v496, 127
    %v514 = vpop.permute.xlu0 %513
    %v515 = vsel %vm474, %v504, %v506
    %v516 = vsel %vm474, %v506, %v508
    %v517 = vsel %vm474, %v510, %v512
    %v518 = vsel %vm474, %v512, %v514
    %v523 = vsel %vm276, %v515, 0.0
    %v524 = vsel %vm277, %v516, 0.0
    %v525 = vsel %vm276, %v517, 0.0
    %v526 = vsel %vm277, %v518, 0.0
    %v527 = vpack.c.bf16 %v525, %v523
    %v528 = vpack.c.bf16 %v526, %v524
    %529 = vst [vmem:[#allocation3 + $0xb0] sm:$0xff] %v527
    %530 = vst [vmem:[#allocation3 + $0xb8] sm:$0xff] %v528
    %v531 = vld [vmem:[#allocation2 + $0x8] sm:$0xff]
    %v532 = vld [vmem:[#allocation2 + $0x10] sm:$0xff]
    %v533 = vld [vmem:[#allocation2 + $0x18] sm:$0xff]
    %v534 = vld [vmem:[#allocation2 + $0x40] sm:$0xff]
    %v535 = vld [vmem:[#allocation2 + $0x48] sm:$0xff]
    %v536 = vld [vmem:[#allocation2 + $0x50] sm:$0xff]
    %543 = vrot.lane.b32.xlu0 %v531, 113
    %v544 = vpop.permute.xlu0 %543
    %545 = vrot.lane.b32.xlu0 %v532, 113
    %v546 = vpop.permute.xlu0 %545
    %547 = vrot.lane.b32.xlu0 %v533, 113
    %v548 = vpop.permute.xlu0 %547
    %549 = vrot.lane.b32.xlu0 %v534, 113
    %v550 = vpop.permute.xlu0 %549
    %551 = vrot.lane.b32.xlu0 %v535, 113
    %v552 = vpop.permute.xlu0 %551
    %553 = vrot.lane.b32.xlu0 %v536, 113
    %v554 = vpop.permute.xlu0 %553
    %vm555 = vcmask 924672
    %v556 = vsel %vm555, %v544, %v546
    %v557 = vsel %vm555, %v546, %v548
    %v558 = vsel %vm555, %v550, %v552
    %v559 = vsel %vm555, %v552, %v554
    %v564 = vsel %vm142, %v556, 0.0
    %v565 = vsel %vm143, %v557, 0.0
    %v566 = vsel %vm142, %v558, 0.0
    %v567 = vsel %vm143, %v559, 0.0
    %v568 = vpack.c.bf16 %v566, %v564
    %v569 = vpack.c.bf16 %v567, %v565
    %570 = vst [vmem:[#allocation3 + $0xc0] sm:$0xff] %v568
    %571 = vst [vmem:[#allocation3 + $0xc8] sm:$0xff] %v569
    %v572 = vld [vmem:[#allocation2 + $0x20] sm:$0xff]
    %v573 = vld [vmem:[#allocation2 + $0x28] sm:$0xff]
    %v574 = vld [vmem:[#allocation2 + $0x30] sm:$0xff]
    %v575 = vld [vmem:[#allocation2 + $0x58] sm:$0xff]
    %v576 = vld [vmem:[#allocation2 + $0x60] sm:$0xff]
    %v577 = vld [vmem:[#allocation2 + $0x68] sm:$0xff]
    %584 = vrot.lane.b32.xlu0 %v572, 113
    %v585 = vpop.permute.xlu0 %584
    %586 = vrot.lane.b32.xlu0 %v573, 113
    %v587 = vpop.permute.xlu0 %586
    %588 = vrot.lane.b32.xlu0 %v574, 113
    %v589 = vpop.permute.xlu0 %588
    %590 = vrot.lane.b32.xlu0 %v575, 113
    %v591 = vpop.permute.xlu0 %590
    %592 = vrot.lane.b32.xlu0 %v576, 113
    %v593 = vpop.permute.xlu0 %592
    %594 = vrot.lane.b32.xlu0 %v577, 113
    %v595 = vpop.permute.xlu0 %594
    %v596 = vsel %vm555, %v585, %v587
    %v597 = vsel %vm555, %v587, %v589
    %v598 = vsel %vm555, %v591, %v593
    %v599 = vsel %vm555, %v593, %v595
    %v604 = vsel %vm142, %v596, 0.0
    %v605 = vsel %vm143, %v597, 0.0
    %v606 = vsel %vm142, %v598, 0.0
    %v607 = vsel %vm143, %v599, 0.0
    %v608 = vpack.c.bf16 %v606, %v604
    %v609 = vpack.c.bf16 %v607, %v605
    %610 = vst [vmem:[#allocation3 + $0xd0] sm:$0xff] %v608
    %611 = vst [vmem:[#allocation3 + $0xd8] sm:$0xff] %v609
    %v612 = vld [vmem:[#allocation2 + $0x8] sm:$0xff]
    %v613 = vld [vmem:[#allocation2 + $0x10] sm:$0xff]
    %v614 = vld [vmem:[#allocation2 + $0x18] sm:$0xff]
    %v615 = vld [vmem:[#allocation2 + $0x40] sm:$0xff]
    %v616 = vld [vmem:[#allocation2 + $0x48] sm:$0xff]
    %v617 = vld [vmem:[#allocation2 + $0x50] sm:$0xff]
    %v618 = vpack.c.bf16 %v615, %v612
    %v619 = vpack.c.bf16 %v616, %v613
    %v620 = vpack.c.bf16 %v617, %v614
    %624 = vrot.lane.b32.xlu0 %v618, 112
    %v625 = vpop.permute.xlu0 %624
    %626 = vrot.lane.b32.xlu0 %v619, 112
    %v627 = vpop.permute.xlu0 %626
    %628 = vrot.lane.b32.xlu0 %v620, 112
    %v629 = vpop.permute.xlu0 %628
    %vm630 = vcmask 916480
    %v631 = vsel %vm630, %v625, %v627
    %v632 = vsel %vm630, %v627, %v629
    %635 = vst [vmem:[#allocation3 + $0xe0] sm:$0xff] %v631
    %636 = vst [vmem:[#allocation3 + $0xe8] sm:$0xff] %v632
    %v637 = vld [vmem:[#allocation2 + $0x20] sm:$0xff]
    %v638 = vld [vmem:[#allocation2 + $0x28] sm:$0xff]
    %v639 = vld [vmem:[#allocation2 + $0x30] sm:$0xff]
    %v640 = vld [vmem:[#allocation2 + $0x58] sm:$0xff]
    %v641 = vld [vmem:[#allocation2 + $0x60] sm:$0xff]
    %v642 = vld [vmem:[#allocation2 + $0x68] sm:$0xff]
    %v643 = vpack.c.bf16 %v640, %v637
    %v644 = vpack.c.bf16 %v641, %v638
    %v645 = vpack.c.bf16 %v642, %v639
    %649 = vrot.lane.b32.xlu0 %v643, 112
    %v650 = vpop.permute.xlu0 %649
    %651 = vrot.lane.b32.xlu0 %v644, 112
    %v652 = vpop.permute.xlu0 %651
    %653 = vrot.lane.b32.xlu0 %v645, 112
    %v654 = vpop.permute.xlu0 %653
    %v655 = vsel %vm630, %v650, %v652
    %v656 = vsel %vm630, %v652, %v654
    %659 = vst [vmem:[#allocation3 + $0xf0] sm:$0xff] %v655
    %660 = vst [vmem:[#allocation3 + $0xf8] sm:$0xff] %v656
    %v661 = vld [vmem:[#allocation2 + $0x8] sm:$0xff]
    %v662 = vld [vmem:[#allocation2 + $0x10] sm:$0xff]
    %v663 = vld [vmem:[#allocation2 + $0x18] sm:$0xff]
    %v664 = vld [vmem:[#allocation2 + $0x40] sm:$0xff]
    %v665 = vld [vmem:[#allocation2 + $0x48] sm:$0xff]
    %v666 = vld [vmem:[#allocation2 + $0x50] sm:$0xff]
    %673 = vrot.lane.b32.xlu0 %v661, 111
    %v674 = vpop.permute.xlu0 %673
    %675 = vrot.lane.b32.xlu0 %v662, 111
    %v676 = vpop.permute.xlu0 %675
    %677 = vrot.lane.b32.xlu0 %v663, 111
    %v678 = vpop.permute.xlu0 %677
    %679 = vrot.lane.b32.xlu0 %v664, 111
    %v680 = vpop.permute.xlu0 %679
    %681 = vrot.lane.b32.xlu0 %v665, 111
    %v682 = vpop.permute.xlu0 %681
    %683 = vrot.lane.b32.xlu0 %v666, 111
    %v684 = vpop.permute.xlu0 %683
    %vm685 = vcmask 908288
    %v686 = vsel %vm685, %v674, %v676
    %v687 = vsel %vm685, %v676, %v678
    %v688 = vsel %vm685, %v680, %v682
    %v689 = vsel %vm685, %v682, %v684
    %v694 = vsel %vm276, %v686, 0.0
    %v695 = vsel %vm277, %v687, 0.0
    %v696 = vsel %vm276, %v688, 0.0
    %v697 = vsel %vm277, %v689, 0.0
    %v698 = vpack.c.bf16 %v696, %v694
    %v699 = vpack.c.bf16 %v697, %v695
    %700 = vst [vmem:[#allocation3 + $0x100] sm:$0xff] %v698
    %701 = vst [vmem:[#allocation3 + $0x108] sm:$0xff] %v699
    %v702 = vld [vmem:[#allocation2 + $0x20] sm:$0xff]
    %v703 = vld [vmem:[#allocation2 + $0x28] sm:$0xff]
    %v704 = vld [vmem:[#allocation2 + $0x30] sm:$0xff]
    %v705 = vld [vmem:[#allocation2 + $0x58] sm:$0xff]
    %v706 = vld [vmem:[#allocation2 + $0x60] sm:$0xff]
    %v707 = vld [vmem:[#allocation2 + $0x68] sm:$0xff]
    %714 = vrot.lane.b32.xlu0 %v702, 111
    %v715 = vpop.permute.xlu0 %714
    %716 = vrot.lane.b32.xlu0 %v703, 111
    %v717 = vpop.permute.xlu0 %716
    %718 = vrot.lane.b32.xlu0 %v704, 111
    %v719 = vpop.permute.xlu0 %718
    %720 = vrot.lane.b32.xlu0 %v705, 111
    %v721 = vpop.permute.xlu0 %720
    %722 = vrot.lane.b32.xlu0 %v706, 111
    %v723 = vpop.permute.xlu0 %722
    %724 = vrot.lane.b32.xlu0 %v707, 111
    %v725 = vpop.permute.xlu0 %724
    %v726 = vsel %vm685, %v715, %v717
    %v727 = vsel %vm685, %v717, %v719
    %v728 = vsel %vm685, %v721, %v723
    %v729 = vsel %vm685, %v723, %v725
    %v734 = vsel %vm276, %v726, 0.0
    %v735 = vsel %vm277, %v727, 0.0
    %v736 = vsel %vm276, %v728, 0.0
    %v737 = vsel %vm277, %v729, 0.0
    %v738 = vpack.c.bf16 %v736, %v734
    %v739 = vpack.c.bf16 %v737, %v735
    %740 = vst [vmem:[#allocation3 + $0x110] sm:$0xff] %v738
    %741 = vst [vmem:[#allocation3 + $0x118] sm:$0xff] %v739
    %v742 = vld [vmem:[#allocation10] sm:$0xff]
    %v743 = vld [vmem:[#allocation10 + $0x8] sm:$0xff]
    %v744 = vld [vmem:[#allocation10 + $0x10] sm:$0xff]
    %v745 = vld [vmem:[#allocation10 + $0x18] sm:$0xff]
    %v746 = vld [vmem:[#allocation3] sm:$0xff]
    %v747 = vld [vmem:[#allocation3 + $0x8] sm:$0xff]
    %v748 = vld [vmem:[#allocation3 + $0x10] sm:$0xff]
    %v749 = vld [vmem:[#allocation3 + $0x18] sm:$0xff]
    %v750 = vld [vmem:[#allocation3 + $0x20] sm:$0xff]
    %v751 = vld [vmem:[#allocation3 + $0x28] sm:$0xff]
    %v752 = vld [vmem:[#allocation3 + $0x30] sm:$0xff]
    %v753 = vld [vmem:[#allocation3 + $0x38] sm:$0xff]
    %v754 = vld [vmem:[#allocation3 + $0x40] sm:$0xff]
    %v755 = vld [vmem:[#allocation3 + $0x48] sm:$0xff]
    %v756 = vld [vmem:[#allocation3 + $0x50] sm:$0xff]
    %v757 = vld [vmem:[#allocation3 + $0x58] sm:$0xff]
    %v758 = vld [vmem:[#allocation3 + $0x60] sm:$0xff]
    %v759 = vld [vmem:[#allocation3 + $0x68] sm:$0xff]
    %v760 = vld [vmem:[#allocation3 + $0x70] sm:$0xff]
    %v761 = vld [vmem:[#allocation3 + $0x78] sm:$0xff]
    %v762 = vld [vmem:[#allocation3 + $0x80] sm:$0xff]
    %v763 = vld [vmem:[#allocation3 + $0x88] sm:$0xff]
    %v764 = vld [vmem:[#allocation3 + $0x90] sm:$0xff]
    %v765 = vld [vmem:[#allocation3 + $0x98] sm:$0xff]
    %v766 = vld [vmem:[#allocation3 + $0xa0] sm:$0xff]
    %v767 = vld [vmem:[#allocation3 + $0xa8] sm:$0xff]
    %v768 = vld [vmem:[#allocation3 + $0xb0] sm:$0xff]
    %v769 = vld [vmem:[#allocation3 + $0xb8] sm:$0xff]
    %v770 = vld [vmem:[#allocation3 + $0xc0] sm:$0xff]
    %v771 = vld [vmem:[#allocation3 + $0xc8] sm:$0xff]
    %v772 = vld [vmem:[#allocation3 + $0xd0] sm:$0xff]
    %v773 = vld [vmem:[#allocation3 + $0xd8] sm:$0xff]
    %v774 = vld [vmem:[#allocation3 + $0xe0] sm:$0xff]
    %v775 = vld [vmem:[#allocation3 + $0xe8] sm:$0xff]
    %v776 = vld [vmem:[#allocation3 + $0xf0] sm:$0xff]
    %v777 = vld [vmem:[#allocation3 + $0xf8] sm:$0xff]
    %v778 = vld [vmem:[#allocation3 + $0x100] sm:$0xff]
    %v779 = vld [vmem:[#allocation3 + $0x108] sm:$0xff]
    %v780 = vld [vmem:[#allocation3 + $0x110] sm:$0xff]
    %v781 = vld [vmem:[#allocation3 + $0x118] sm:$0xff]
    %v786 = vunpack.c.l.b16 %v742
    %v787 = vunpack.c.h.b16 %v742
    %v788 = vunpack.c.l.b16 %v743
    %v789 = vunpack.c.h.b16 %v743
    %v790 = vunpack.c.l.b16 %v744
    %v791 = vunpack.c.h.b16 %v744
    %v792 = vunpack.c.l.b16 %v745
    %v793 = vunpack.c.h.b16 %v745
    %v794 = vpack.c.b16 %v788, %v786
    %v795 = vpack.c.b16 %v789, %v787
    %v796 = vpack.c.b16 %v792, %v790
    %v797 = vpack.c.b16 %v793, %v791
    %vm800 = vcmask 130048
    %v802 = vsel %vm800, %v795, 0
    %v805 = vsel %vm800, %v797, 0
    %807 = vmatprep.subr.bf16.mxu0 %v747
    %808 = vmatpush1.bf16.msra.mxu0 %v746
    %809 = vmatprep.subr.bf16.mxu0 %v751
    %810 = vmatpush1.bf16.msra.mxu0 %v750
    %811 = vmatprep.subr.bf16.mxu0 %v755
    %812 = vmatpush1.bf16.msra.mxu0 %v754
    %813 = vmatprep.subr.bf16.mxu0 %v759
    %814 = vmatpush1.bf16.msra.mxu0 %v758
    %815 = vmatprep.subr.bf16.mxu0 %v763
    %816 = vmatpush1.bf16.msra.mxu0 %v762
    %817 = vmatprep.subr.bf16.mxu0 %v767
    %818 = vmatpush1.bf16.msra.mxu0 %v766
    %819 = vmatprep.subr.bf16.mxu0 %v771
    %820 = vmatpush1.bf16.msra.mxu0 %v770
    %821 = vmatprep.subr.bf16.mxu0 %v775
    %822 = vmatpush1.bf16.msra.mxu0 %v774
    %823 = vmatprep.subr.bf16.mxu0 %v779
    %824 = vmatpush1.bf16.msra.mxu0 %v778
    %825 = vmatprep.subr.bf16.mxu0 0
    %826 = vmatpush1.bf16.msra.mxu0 0
    %827 = vmatprep.subr.bf16.mxu0 0
    %828 = vmatpush1.bf16.msra.mxu0 0
    %829 = vmatprep.subr.bf16.mxu0 0
    %830 = vmatpush1.bf16.msra.mxu0 0
    %831 = vmatprep.subr.bf16.mxu0 0
    %832 = vmatpush1.bf16.msra.mxu0 0
    %833 = vmatprep.subr.bf16.mxu0 0
    %834 = vmatpush1.bf16.msra.mxu0 0
    %835 = vmatprep.subr.bf16.mxu0 0
    %836 = vmatpush1.bf16.msra.mxu0 0
    %837 = vmatprep.subr.bf16.mxu0 0
    %838 = vmatpush1.bf16.msra.mxu0 0
    %839 = vmatprep.mubr.bf16.mxu0 %v802
    %840 = vmatmul.mubr.bf16.gmra.mrb[0].mxu0 %v794
    %v841 = vpop.f32.mrb[0].mxu0
    %v842 = vadd.f32 0.0, %v841
    %v843 = vpop.f32.mrb[0].mxu0
    %v844 = vadd.f32 0.0, %v843
    %v845 = vpop.f32.mrb[0].mxu0
    %v846 = vadd.f32 0.0, %v845
    %v847 = vpop.f32.mrb[0].mxu0
    %v848 = vadd.f32 0.0, %v847
    %849 = vmatprep.mubr.bf16.mxu0 %v805
    %850 = vmatmul.mubr.bf16.gmra.mrb[0].mxu0 %v796
    %v851 = vpop.f32.mrb[0].mxu0
    %v852 = vadd.f32 0.0, %v851
    %v853 = vpop.f32.mrb[0].mxu0
    %v854 = vadd.f32 0.0, %v853
    %v855 = vpop.f32.mrb[0].mxu0
    %v856 = vadd.f32 0.0, %v855
    %v857 = vpop.f32.mrb[0].mxu0
    %v858 = vadd.f32 0.0, %v857
    %859 = vdwg.mxu0
    %860 = vmatprep.subr.bf16.mxu0 %v749
    %861 = vmatpush1.bf16.msra.mxu0 %v748
    %862 = vmatprep.subr.bf16.mxu0 %v753
    %863 = vmatpush1.bf16.msra.mxu0 %v752
    %864 = vmatprep.subr.bf16.mxu0 %v757
    %865 = vmatpush1.bf16.msra.mxu0 %v756
    %866 = vmatprep.subr.bf16.mxu0 %v761
    %867 = vmatpush1.bf16.msra.mxu0 %v760
    %868 = vmatprep.subr.bf16.mxu0 %v765
    %869 = vmatpush1.bf16.msra.mxu0 %v764
    %870 = vmatprep.subr.bf16.mxu0 %v769
    %871 = vmatpush1.bf16.msra.mxu0 %v768
    %872 = vmatprep.subr.bf16.mxu0 %v773
    %873 = vmatpush1.bf16.msra.mxu0 %v772
    %874 = vmatprep.subr.bf16.mxu0 %v777
    %875 = vmatpush1.bf16.msra.mxu0 %v776
    %876 = vmatprep.subr.bf16.mxu0 %v781
    %877 = vmatpush1.bf16.msra.mxu0 %v780
    %878 = vmatprep.subr.bf16.mxu0 0
    %879 = vmatpush1.bf16.msra.mxu0 0
    %880 = vmatprep.subr.bf16.mxu0 0
    %881 = vmatpush1.bf16.msra.mxu0 0
    %882 = vmatprep.subr.bf16.mxu0 0
    %883 = vmatpush1.bf16.msra.mxu0 0
    %884 = vmatprep.subr.bf16.mxu0 0
    %885 = vmatpush1.bf16.msra.mxu0 0
    %886 = vmatprep.subr.bf16.mxu0 0
    %887 = vmatpush1.bf16.msra.mxu0 0
    %888 = vmatprep.subr.bf16.mxu0 0
    %889 = vmatpush1.bf16.msra.mxu0 0
    %890 = vmatprep.subr.bf16.mxu0 0
    %891 = vmatpush1.bf16.msra.mxu0 0
    %892 = vmatprep.mubr.bf16.mxu0 %v802
    %893 = vmatmul.mubr.bf16.gmra.mrb[0].mxu0 %v794
    %v894 = vpop.f32.mrb[0].mxu0
    %v895 = vadd.f32 0.0, %v894
    %v896 = vpop.f32.mrb[0].mxu0
    %v897 = vadd.f32 0.0, %v896
    %v898 = vpop.f32.mrb[0].mxu0
    %v899 = vadd.f32 0.0, %v898
    %v900 = vpop.f32.mrb[0].mxu0
    %v901 = vadd.f32 0.0, %v900
    %902 = vmatprep.mubr.bf16.mxu0 %v805
    %903 = vmatmul.mubr.bf16.gmra.mrb[0].mxu0 %v796
    %v904 = vpop.f32.mrb[0].mxu0
    %v905 = vadd.f32 0.0, %v904
    %v906 = vpop.f32.mrb[0].mxu0
    %v907 = vadd.f32 0.0, %v906
    %v908 = vpop.f32.mrb[0].mxu0
    %v909 = vadd.f32 0.0, %v908
    %v910 = vpop.f32.mrb[0].mxu0
    %v911 = vadd.f32 0.0, %v910
    %912 = vdwg.mxu0
    %v913 = vmul.f32 %v842, 0.5
    %v914 = vmul.f32 %v844, 0.5
    %v915 = vmul.f32 %v895, 0.5
    %v916 = vmul.f32 %v897, 0.5
    %v917 = vmul.f32 %v846, 0.5
    %v918 = vmul.f32 %v848, 0.5
    %v919 = vmul.f32 %v899, 0.5
    %v920 = vmul.f32 %v901, 0.5
    %v921 = vmul.f32 %v852, 0.5
    %v922 = vmul.f32 %v854, 0.5
    %v923 = vmul.f32 %v905, 0.5
    %v924 = vmul.f32 %v907, 0.5
    %v925 = vtanh.pop %v913
    %v926 = vtanh.pop %v914
    %v927 = vtanh.pop %v915
    %v928 = vtanh.pop %v916
    %v929 = vtanh.pop %v917
    %v930 = vtanh.pop %v918
    %v931 = vtanh.pop %v919
    %v932 = vtanh.pop %v920
    %v933 = vtanh.pop %v921
    %v934 = vtanh.pop %v922
    %v935 = vtanh.pop %v923
    %v936 = vtanh.pop %v924
    %v937 = vmul.f32 %v925, 0.5
    %v938 = vmul.f32 %v926, 0.5
    %v939 = vmul.f32 %v927, 0.5
    %v940 = vmul.f32 %v928, 0.5
    %v941 = vmul.f32 %v929, 0.5
    %v942 = vmul.f32 %v930, 0.5
    %v943 = vmul.f32 %v931, 0.5
    %v944 = vmul.f32 %v932, 0.5
    %v945 = vmul.f32 %v933, 0.5
    %v946 = vmul.f32 %v934, 0.5
    %v947 = vmul.f32 %v935, 0.5
    %v948 = vmul.f32 %v936, 0.5
    %v949 = vadd.f32 %v937, 0.5
    %v950 = vadd.f32 %v938, 0.5
    %v951 = vadd.f32 %v939, 0.5
    %v952 = vadd.f32 %v940, 0.5
    %v953 = vadd.f32 %v941, 0.5
    %v954 = vadd.f32 %v942, 0.5
    %v955 = vadd.f32 %v943, 0.5
    %v956 = vadd.f32 %v944, 0.5
    %v957 = vadd.f32 %v945, 0.5
    %v958 = vadd.f32 %v946, 0.5
    %v959 = vadd.f32 %v947, 0.5
    %v960 = vadd.f32 %v948, 0.5
    %v961 = vtanh.pop %v856
    %v962 = vtanh.pop %v858
    %v963 = vtanh.pop %v909
    %v964 = vtanh.pop %v911
    %v965 = vld [vmem:[#allocation9] sm:$0xff]
    %v966 = vld [vmem:[#allocation9 + $0x8] sm:$0xff]
    %v967 = vmul.f32 %v953, %v965
    %v968 = vmul.f32 %v954, %v966
    %v969 = vmul.f32 %v949, %v961
    %v970 = vmul.f32 %v950, %v962
    %v971 = vadd.f32 %v967, %v969
    %v972 = vadd.f32 %v968, %v970
    %v973 = vtanh.pop %v971
    %v974 = vtanh.pop %v972
    %v975 = vmul.f32 %v957, %v973
    %v976 = vmul.f32 %v958, %v974
    %977 = vst [vmem:[#allocation12] sm:$0xff] %v975
    %978 = vst [vmem:[#allocation12 + $0x8] sm:$0xff] %v976
    %979 = vst [vmem:[#allocation12 + $0x10] sm:$0xff] %v971
    %980 = vst [vmem:[#allocation12 + $0x18] sm:$0xff] %v972
    %981 = vst [vmem:[#allocation12 + $0x20] sm:$0xff] %v949
    %982 = vst [vmem:[#allocation12 + $0x28] sm:$0xff] %v950
    %983 = vst [vmem:[#allocation12 + $0x30] sm:$0xff] %v953
    %984 = vst [vmem:[#allocation12 + $0x38] sm:$0xff] %v954
    %985 = vst [vmem:[#allocation12 + $0x40] sm:$0xff] %v957
    %986 = vst [vmem:[#allocation12 + $0x48] sm:$0xff] %v958
    %987 = vst [vmem:[#allocation12 + $0x50] sm:$0xff] %v961
    %988 = vst [vmem:[#allocation12 + $0x58] sm:$0xff] %v962
    %s989 = scalar_lea.vmem [#allocation9], 16
    %v990 = vld [vmem:[%s989] sm:$0xff]
    %v991 = vld [vmem:[%s989 + $0x8] sm:$0xff]
    %v992 = vmul.f32 %v955, %v990
    %v993 = vmul.f32 %v956, %v991
    %v994 = vmul.f32 %v951, %v963
    %v995 = vmul.f32 %v952, %v964
    %v996 = vadd.f32 %v992, %v994
    %v997 = vadd.f32 %v993, %v995
    %v998 = vtanh.pop %v996
    %v999 = vtanh.pop %v997
    %v1000 = vmul.f32 %v959, %v998
    %v1001 = vmul.f32 %v960, %v999
    %s1002 = scalar_lea.vmem [#allocation12], 96
    %1003 = vst [vmem:[%s1002] sm:$0xff] %v1000
    %1004 = vst [vmem:[%s1002 + $0x8] sm:$0xff] %v1001
    %1005 = vst [vmem:[%s1002 + $0x10] sm:$0xff] %v996
    %1006 = vst [vmem:[%s1002 + $0x18] sm:$0xff] %v997
    %1007 = vst [vmem:[%s1002 + $0x20] sm:$0xff] %v951
    %1008 = vst [vmem:[%s1002 + $0x28] sm:$0xff] %v952
    %1009 = vst [vmem:[%s1002 + $0x30] sm:$0xff] %v955
    %1010 = vst [vmem:[%s1002 + $0x38] sm:$0xff] %v956
    %1011 = vst [vmem:[%s1002 + $0x40] sm:$0xff] %v959
    %1012 = vst [vmem:[%s1002 + $0x48] sm:$0xff] %v960
    %1013 = vst [vmem:[%s1002 + $0x50] sm:$0xff] %v963
    %1014 = vst [vmem:[%s1002 + $0x58] sm:$0xff] %v964
    // Predicated region
    $region34: #{tpu_custom_call.1} parent=1 // pred_check
      _
    $region35: #{tpu_custom_call.1} parent=1 // pred_check_branch
      %1016 = sbr.rel (0) target = $region37
    $region36: #{tpu_custom_call.1} parent=1 // pred_region
      %s1018 = ssub.s32 3072, 3072
      %1019 = vsyncadd [#allocation6], %s1018
      %s1020 = sshll.u32 [#allocation12], 4
      %s1021 = int_to_ptr.vmem [resolvable:$true] %s1020
      %1026 = dma.vmem_to_hbm [thread:$0]  %s1021, 3072, %s4, [#allocation6], 256, 256, 16
    $region37: #{tpu_custom_call.1} parent=1 // pred_fallthru
      _
    // Predicated region
    $region38: #{tpu_custom_call.1} parent=1 // pred_check
      _
    $region39: #{tpu_custom_call.1} parent=1 // pred_check_branch
      %1028 = sbr.rel (0) target = $region41
    $region40: #{tpu_custom_call.1} parent=1 // pred_region
      %1029 = dma.done [#allocation6], 3072
    $region41: #{tpu_custom_call.1} parent=1 // pred_fallthru
      _
    %1030 = vsyncpa [#allocation5], 1
    %1031 = vsyncpa [#allocation8], 1
    %1032 = vsyncpa [#allocation11], 1
    %1033 = vsyncpa [#allocation6], 1

</llo_original>
